<compile_context>
chip_gen: v5e
topology: v5e:2x2
jax: 0.10.0
libtpu: 0.0.40
codegen_flags: <defaults>
</compile_context>

<pallas_src>
import math

import jax
import jax.numpy as jnp
from jax.experimental import pallas as pl
from jax.experimental.pallas import tpu as pltpu

IN_DIM = 16
HIDDEN_DIM = 32
OUT_DIM = 4
LN_EPS = 1e-5
_HIGHEST = jax.lax.Precision.HIGHEST

# Parameter slab layout: one (HIDDEN_DIM, 128) f32 array (single resident block).
#   [:,   0:16 ]  W0   (32, 16)   (out_features, in_features)
#   [:,  16:48 ]  W1   (32, 32)
#   [0:4, 48:80]  W2   ( 4, 32)
#   [:,  80:81 ]  b0   (32, 1)
#   [:,  81:82 ]  g0   (32, 1)    LayerNorm gamma, layer 0
#   [:,  82:83 ]  be0  (32, 1)    LayerNorm beta,  layer 0
#   [:,  83:84 ]  b1   (32, 1)
#   [:,  84:85 ]  g1   (32, 1)
#   [:,  85:86 ]  be1  (32, 1)
#   [0:4, 86:87]  b2   ( 4, 1)
SLAB_COLS = 128

# 48 MiB scoped VMEM: above the 16/32 MiB defaults (v5e / v6e+v7x) but well
# under v7x's 64 MiB physical VMEM.  Actual use is ~30 MiB at the largest tile.
_VMEM_LIMIT_BYTES = 48 * 1024 * 1024


def _layernorm_relu_featfirst(h, gamma, beta):
    # nn.LayerNorm over the feature axis (axis 0 = sublanes), biased variance,
    # eps=1e-5, followed by ReLU.
    mu = jnp.mean(h, axis=0, keepdims=True)
    var = jnp.mean((h - mu) ** 2, axis=0, keepdims=True)
    hn = (h - mu) * jax.lax.rsqrt(var + LN_EPS)
    return jnp.maximum(hn * gamma + beta, 0.0)


def _make_kernel(natural_x):
    """Kernel body. Points live on the 128-lane axis, features on sublanes.

    natural_x=False: x_ref is (IN_DIM, tile)  (feature-major, preferred).
    natural_x=True : x_ref is (tile, IN_DIM)  (contiguous row-major HBM block);
        the relayout is fused into the layer-0 MXU contraction (w0 @ x^T).
    """

    def kernel(x_ref, p_ref, o_ref):
        # Static slices of the resident parameter slab (tiny VMEM loads).
        w0 = p_ref[:, 0:16]                 # (32, 16)
        w1 = p_ref[:, 16:48]                # (32, 32)
        w2 = p_ref[0:OUT_DIM, 48:80]        # (4, 32)
        b0 = p_ref[:, 80:81]                # (32, 1)
        g0 = p_ref[:, 81:82]
        be0 = p_ref[:, 82:83]
        b1 = p_ref[:, 83:84]
        g1 = p_ref[:, 84:85]
        be1 = p_ref[:, 85:86]
        b2 = p_ref[0:OUT_DIM, 86:87]        # (4, 1)

        x = x_ref[...].astype(jnp.float32)

        # Layer 0: Linear -> LayerNorm -> ReLU.  Result (32, tile), lane-dense.
        if natural_x:
            # h[f, p] = sum_k w0[f, k] * x[p, k]  — contraction over x's lane
            # axis; the (tile,16)->(16,tile) relayout rides the MXU operand
            # path and hides under the block DMA.
            h = jax.lax.dot_general(
                w0, x, (((1,), (1,)), ((), ())),
                preferred_element_type=jnp.float32, precision=_HIGHEST)
        else:
            h = jnp.dot(w0, x, preferred_element_type=jnp.float32,
                        precision=_HIGHEST)
        h = _layernorm_relu_featfirst(h + b0, g0, be0)

        # Layer 1: Linear -> LayerNorm -> ReLU.
        h = jnp.dot(w1, h, preferred_element_type=jnp.float32,
                    precision=_HIGHEST) + b1
        h = _layernorm_relu_featfirst(h, g1, be1)

        # Layer 2: outmost Linear (no LN / activation); (4, tile) lane-dense store.
        o = jnp.dot(w2, h, preferred_element_type=jnp.float32,
                    precision=_HIGHEST) + b2
        o_ref[...] = o.astype(o_ref.dtype)

    return kernel


def _choose_tile(n, tile_cap, min_steps=6):
    """Largest 128-multiple lane tile <= tile_cap that still yields >= min_steps
    grid steps for large inputs (>= 3 pipelined steps per v7x TensorCore)."""
    tile = min(tile_cap, max(128, pl.cdiv(n, min_steps)))
    return pl.cdiv(tile, 128) * 128


def _cost(n, itemsize):
    flops = 2 * n * (IN_DIM * HIDDEN_DIM + HIDDEN_DIM * HIDDEN_DIM
                     + HIDDEN_DIM * OUT_DIM)
    bytes_accessed = n * (IN_DIM + OUT_DIM) * itemsize + HIDDEN_DIM * SLAB_COLS * 4
    return pl.CostEstimate(flops=flops, transcendentals=2 * n,
                           bytes_accessed=bytes_accessed)


def implicit_field_forward_fm(x_fm, params_slab, *, tile_n=32768):
    """Preferred zero-copy contract: feature-major x_fm (IN_DIM, N) -> (OUT_DIM, N).

    x_fm may be float32 or bfloat16; internal math is float32.
    """
    in_dim, n = x_fm.shape
    assert in_dim == IN_DIM
    assert params_slab.shape == (HIDDEN_DIM, SLAB_COLS)

    tile = _choose_tile(n, tile_n)
    grid = (pl.cdiv(n, tile),)   # trailing partial block handled by Pallas masking

    return pl.pallas_call(
        _make_kernel(natural_x=False),
        out_shape=jax.ShapeDtypeStruct((OUT_DIM, n), x_fm.dtype),
        grid=grid,
        in_specs=[
            # If xprof ever shows exposed DMA at step boundaries, add
            # pipeline_mode=pl.Buffered(3) here (buffers are only ~2 MiB).
            pl.BlockSpec((IN_DIM, tile), lambda i: (0, i)),
            pl.BlockSpec((HIDDEN_DIM, SLAB_COLS), lambda i: (0, 0)),
        ],
        out_specs=pl.BlockSpec((OUT_DIM, tile), lambda i: (0, i)),
        compiler_params=pltpu.CompilerParams(
            dimension_semantics=("parallel",),
            vmem_limit_bytes=_VMEM_LIMIT_BYTES),
        cost_estimate=_cost(n, x_fm.dtype.itemsize),
    )(x_fm, params_slab)


def implicit_field_forward(x, params_slab, *, tile_n=8192):
    """PyTorch-layout entry: x (N, IN_DIM) -> (N, OUT_DIM).

    The input is consumed directly as contiguous (tile, IN_DIM) HBM blocks (no
    wrapper transpose / pad); the relayout happens inside the kernel on the
    layer-0 MXU contraction.  Only the small (4,N)->(N,4) output de-transpose
    remains outside — fuse it into the consumer (or use the feature-major entry
    point) to stay at the ~80 B/point HBM roofline.

    tile_n defaults to 8192 because a (tile, 16) f32 block lane-pads 8x in
    VMEM; this keeps the double-buffered input block <= 8 MiB (v7x-safe).
    """
    n, in_dim = x.shape
    assert in_dim == IN_DIM
    assert params_slab.shape == (HIDDEN_DIM, SLAB_COLS)

    tile = _choose_tile(n, tile_n)
    grid = (pl.cdiv(n, tile),)

    out_fm = pl.pallas_call(
        _make_kernel(natural_x=True),
        out_shape=jax.ShapeDtypeStruct((OUT_DIM, n), x.dtype),
        grid=grid,
        in_specs=[
            pl.BlockSpec((tile, IN_DIM), lambda i: (i, 0)),
            pl.BlockSpec((HIDDEN_DIM, SLAB_COLS), lambda i: (0, 0)),
        ],
        out_specs=pl.BlockSpec((OUT_DIM, tile), lambda i: (0, i)),
        compiler_params=pltpu.CompilerParams(
            dimension_semantics=("parallel",),
            vmem_limit_bytes=_VMEM_LIMIT_BYTES),
        cost_estimate=_cost(n, x.dtype.itemsize),
    )(x, params_slab)

    return jnp.transpose(out_fm)            # (N, OUT_DIM)


def init_params(key):
    """Deterministic synthetic init matching ImplicitField parameter shapes.

    Linear weights: kaiming_normal_(fan_in, relu) as in ImplicitField.init_weights
    (std = sqrt(2 / fan_in)); biases: PyTorch default U(-1/sqrt(fan_in), 1/sqrt(fan_in));
    LayerNorm gamma=1, beta=0.  Weights stored PyTorch-style: (out_features, in_features).
    """
    keys = jax.random.split(key, 6)

    def linear(kw, kb, fan_in, fan_out):
        std = math.sqrt(2.0 / fan_in)
        w = jax.random.normal(kw, (fan_out, fan_in), jnp.float32) * std
        bound = 1.0 / math.sqrt(fan_in)
        b = jax.random.uniform(kb, (fan_out,), jnp.float32, -bound, bound)
        return w, b

    w0, b0 = linear(keys[0], keys[1], IN_DIM, HIDDEN_DIM)
    w1, b1 = linear(keys[2], keys[3], HIDDEN_DIM, HIDDEN_DIM)
    w2, b2 = linear(keys[4], keys[5], HIDDEN_DIM, OUT_DIM)
    g0 = jnp.ones((HIDDEN_DIM,), jnp.float32)
    be0 = jnp.zeros((HIDDEN_DIM,), jnp.float32)
    g1 = jnp.ones((HIDDEN_DIM,), jnp.float32)
    be1 = jnp.zeros((HIDDEN_DIM,), jnp.float32)
    return dict(w0=w0, b0=b0, g0=g0, be0=be0,
                w1=w1, b1=b1, g1=g1, be1=be1, w2=w2, b2=b2)


def pack_params(p):
    """Pack all parameters into one (HIDDEN_DIM, 128) f32 slab (layout above)."""
    slab = jnp.zeros((HIDDEN_DIM, SLAB_COLS), jnp.float32)
    slab = slab.at[:, 0:16].set(p["w0"])
    slab = slab.at[:, 16:48].set(p["w1"])
    slab = slab.at[0:OUT_DIM, 48:80].set(p["w2"])
    slab = slab.at[:, 80].set(p["b0"])
    slab = slab.at[:, 81].set(p["g0"])
    slab = slab.at[:, 82].set(p["be0"])
    slab = slab.at[:, 83].set(p["b1"])
    slab = slab.at[:, 84].set(p["g1"])
    slab = slab.at[:, 85].set(p["be1"])
    slab = slab.at[0:OUT_DIM, 86].set(p["b2"])
    return slab


def reference_forward(x, p):
    """Pure-JAX reference in the PyTorch (N, features) layout, f32 / HIGHEST."""
    def ln_relu(h, g, b):
        mu = jnp.mean(h, axis=-1, keepdims=True)
        var = jnp.mean((h - mu) ** 2, axis=-1, keepdims=True)
        return jnp.maximum((h - mu) * jax.lax.rsqrt(var + LN_EPS) * g + b, 0.0)

    h = ln_relu(jnp.dot(x, p["w0"].T, precision=_HIGHEST) + p["b0"],
                p["g0"], p["be0"])
    h = ln_relu(jnp.dot(h, p["w1"].T, precision=_HIGHEST) + p["b1"],
                p["g1"], p["be1"])
    return jnp.dot(h, p["w2"].T, precision=_HIGHEST) + p["b2"]


if __name__ == "__main__":
    key = jax.random.PRNGKey(0)
    k_x, k_p = jax.random.split(key)

    # Small demo shapes; N is deliberately not a multiple of 128 so the
    # partial trailing block (no padding copy) is exercised.
    N = 1000
    x_fm = jax.random.normal(k_x, (IN_DIM, N), jnp.float32)  # feature-major (preferred)
    params = init_params(k_p)
    slab = pack_params(params)

    # Preferred zero-copy path: (16, N) -> (4, N).
    out_fm = jax.block_until_ready(implicit_field_forward_fm(x_fm, slab))
    assert out_fm.shape == (OUT_DIM, N)

    # Reference uses the PyTorch (N, in_dim) layout (test scaffolding only).
    x_rows = jnp.transpose(x_fm)
    ref = reference_forward(x_rows, params)
    assert jnp.allclose(jnp.transpose(out_fm), ref, atol=5e-4, rtol=5e-4), \
        "feature-major kernel mismatch vs. JAX reference"

    # PyTorch-layout entry point (in-kernel input relayout): (N,16) -> (N,4).
    out_rows = jax.block_until_ready(implicit_field_forward(x_rows, slab))
    assert out_rows.shape == (N, OUT_DIM)
    assert jnp.allclose(out_rows, ref, atol=5e-4, rtol=5e-4), \
        "row-major kernel mismatch vs. JAX reference"

    # TODO(synk): MoEFCLayer (experts > 1), skip-connection configs, and
    # use_softplus=True are not implemented; this kernel covers the experts=1,
    # skips=None, outmost_linear=True, with_ln=True path.
    print("KERNEL_OK")
</pallas_src>

<mosaic_0001>
module attributes {stable_mosaic.version = 11 : i64} {
  func.func @kernel(%arg0: i32, %arg1: memref<16x256xf32, #tpu.memory_space<vmem>>, %arg2: memref<32x128xf32, #tpu.memory_space<vmem>>, %arg3: memref<4x256xf32, #tpu.memory_space<vmem>>) attributes {dimension_semantics = [#tpu.dimension_semantics<parallel>], iteration_bounds = array<i64: 4>, scalar_prefetch = 0 : i64, scratch_operands = 0 : i64, tpu.core_type = #tpu.core_type<tc>, window_params = [{transform_indices = @transform_0, window_bounds = array<i64: 16, 256>}, {pipeline_mode = #tpu.pipeline_mode<synchronous>, transform_indices = @transform_1, window_bounds = array<i64: 32, 128>}, {transform_indices = @transform_2, window_bounds = array<i64: 4, 256>}]} {
    %c0 = arith.constant 0 : index
    %c0_0 = arith.constant 0 : index
    %0 = vector.load %arg2[%c0, %c0_0] : memref<32x128xf32, #tpu.memory_space<vmem>>, vector<32x16xf32>
    %c0_1 = arith.constant 0 : index
    %c16 = arith.constant 16 : index
    %1 = vector.load %arg2[%c0_1, %c16] : memref<32x128xf32, #tpu.memory_space<vmem>>, vector<32x32xf32>
    %c0_2 = arith.constant 0 : index
    %c48 = arith.constant 48 : index
    %2 = vector.load %arg2[%c0_2, %c48] : memref<32x128xf32, #tpu.memory_space<vmem>>, vector<4x32xf32>
    %c0_3 = arith.constant 0 : index
    %c80 = arith.constant 80 : index
    %3 = vector.load %arg2[%c0_3, %c80] : memref<32x128xf32, #tpu.memory_space<vmem>>, vector<32x1xf32>
    %c0_4 = arith.constant 0 : index
    %c81 = arith.constant 81 : index
    %4 = vector.load %arg2[%c0_4, %c81] : memref<32x128xf32, #tpu.memory_space<vmem>>, vector<32x1xf32>
    %c0_5 = arith.constant 0 : index
    %c82 = arith.constant 82 : index
    %5 = vector.load %arg2[%c0_5, %c82] : memref<32x128xf32, #tpu.memory_space<vmem>>, vector<32x1xf32>
    %c0_6 = arith.constant 0 : index
    %c83 = arith.constant 83 : index
    %6 = vector.load %arg2[%c0_6, %c83] : memref<32x128xf32, #tpu.memory_space<vmem>>, vector<32x1xf32>
    %c0_7 = arith.constant 0 : index
    %c84 = arith.constant 84 : index
    %7 = vector.load %arg2[%c0_7, %c84] : memref<32x128xf32, #tpu.memory_space<vmem>>, vector<32x1xf32>
    %c0_8 = arith.constant 0 : index
    %c85 = arith.constant 85 : index
    %8 = vector.load %arg2[%c0_8, %c85] : memref<32x128xf32, #tpu.memory_space<vmem>>, vector<32x1xf32>
    %c0_9 = arith.constant 0 : index
    %c86 = arith.constant 86 : index
    %9 = vector.load %arg2[%c0_9, %c86] : memref<32x128xf32, #tpu.memory_space<vmem>>, vector<4x1xf32>
    %c0_10 = arith.constant 0 : index
    %c0_11 = arith.constant 0 : index
    %10 = vector.load %arg1[%c0_10, %c0_11] : memref<16x256xf32, #tpu.memory_space<vmem>>, vector<16x256xf32>
    %cst = arith.constant dense<0.000000e+00> : vector<32x256xf32>
    %11 = tpu.matmul %0, %10, %cst {dimension_numbers = #tpu.dot_dimension_numbers<[1], [0], [0], [1], [0, 0, 1, 1], [], []>, precision = #tpu.contract_precision<fp32>} : vector<32x16xf32>, vector<16x256xf32>, vector<32x256xf32> -> vector<32x256xf32>
    %12 = vector.broadcast %3 : vector<32x1xf32> to vector<32x256xf32>
    %13 = arith.addf %11, %12 : vector<32x256xf32>
    %cst_12 = arith.constant dense<0.000000e+00> : vector<256xf32>
    %14 = vector.multi_reduction <add>, %13, %cst_12 [0] : vector<32x256xf32> to vector<256xf32>
    %15 = vector.shape_cast %14 : vector<256xf32> to vector<1x256xf32>
    %cst_13 = arith.constant 3.200000e+01 : f32
    %16 = vector.broadcast %cst_13 : f32 to vector<1x256xf32>
    %17 = arith.divf %15, %16 : vector<1x256xf32>
    %18 = vector.broadcast %17 : vector<1x256xf32> to vector<32x256xf32>
    %19 = arith.subf %13, %18 : vector<32x256xf32>
    %20 = arith.mulf %19, %19 : vector<32x256xf32>
    %cst_14 = arith.constant dense<0.000000e+00> : vector<256xf32>
    %21 = vector.multi_reduction <add>, %20, %cst_14 [0] : vector<32x256xf32> to vector<256xf32>
    %22 = vector.shape_cast %21 : vector<256xf32> to vector<1x256xf32>
    %cst_15 = arith.constant 3.200000e+01 : f32
    %23 = vector.broadcast %cst_15 : f32 to vector<1x256xf32>
    %24 = arith.divf %22, %23 : vector<1x256xf32>
    %25 = vector.broadcast %17 : vector<1x256xf32> to vector<32x256xf32>
    %26 = arith.subf %13, %25 : vector<32x256xf32>
    %cst_16 = arith.constant 9.99999974E-6 : f32
    %27 = vector.broadcast %cst_16 : f32 to vector<1x256xf32>
    %28 = arith.addf %24, %27 : vector<1x256xf32>
    %29 = math.rsqrt %28 : vector<1x256xf32>
    %30 = vector.broadcast %29 : vector<1x256xf32> to vector<32x256xf32>
    %31 = arith.mulf %26, %30 : vector<32x256xf32>
    %32 = vector.broadcast %4 : vector<32x1xf32> to vector<32x256xf32>
    %33 = arith.mulf %31, %32 : vector<32x256xf32>
    %34 = vector.broadcast %5 : vector<32x1xf32> to vector<32x256xf32>
    %35 = arith.addf %33, %34 : vector<32x256xf32>
    %cst_17 = arith.constant 0.000000e+00 : f32
    %36 = vector.broadcast %cst_17 : f32 to vector<32x256xf32>
    %37 = arith.maximumf %35, %36 : vector<32x256xf32>
    %cst_18 = arith.constant dense<0.000000e+00> : vector<32x256xf32>
    %38 = tpu.matmul %1, %37, %cst_18 {dimension_numbers = #tpu.dot_dimension_numbers<[1], [0], [0], [1], [0, 0, 1, 1], [], []>, precision = #tpu.contract_precision<fp32>} : vector<32x32xf32>, vector<32x256xf32>, vector<32x256xf32> -> vector<32x256xf32>
    %39 = vector.broadcast %6 : vector<32x1xf32> to vector<32x256xf32>
    %40 = arith.addf %38, %39 : vector<32x256xf32>
    %cst_19 = arith.constant dense<0.000000e+00> : vector<256xf32>
    %41 = vector.multi_reduction <add>, %40, %cst_19 [0] : vector<32x256xf32> to vector<256xf32>
    %42 = vector.shape_cast %41 : vector<256xf32> to vector<1x256xf32>
    %cst_20 = arith.constant 3.200000e+01 : f32
    %43 = vector.broadcast %cst_20 : f32 to vector<1x256xf32>
    %44 = arith.divf %42, %43 : vector<1x256xf32>
    %45 = vector.broadcast %44 : vector<1x256xf32> to vector<32x256xf32>
    %46 = arith.subf %40, %45 : vector<32x256xf32>
    %47 = arith.mulf %46, %46 : vector<32x256xf32>
    %cst_21 = arith.constant dense<0.000000e+00> : vector<256xf32>
    %48 = vector.multi_reduction <add>, %47, %cst_21 [0] : vector<32x256xf32> to vector<256xf32>
    %49 = vector.shape_cast %48 : vector<256xf32> to vector<1x256xf32>
    %cst_22 = arith.constant 3.200000e+01 : f32
    %50 = vector.broadcast %cst_22 : f32 to vector<1x256xf32>
    %51 = arith.divf %49, %50 : vector<1x256xf32>
    %52 = vector.broadcast %44 : vector<1x256xf32> to vector<32x256xf32>
    %53 = arith.subf %40, %52 : vector<32x256xf32>
    %cst_23 = arith.constant 9.99999974E-6 : f32
    %54 = vector.broadcast %cst_23 : f32 to vector<1x256xf32>
    %55 = arith.addf %51, %54 : vector<1x256xf32>
    %56 = math.rsqrt %55 : vector<1x256xf32>
    %57 = vector.broadcast %56 : vector<1x256xf32> to vector<32x256xf32>
    %58 = arith.mulf %53, %57 : vector<32x256xf32>
    %59 = vector.broadcast %7 : vector<32x1xf32> to vector<32x256xf32>
    %60 = arith.mulf %58, %59 : vector<32x256xf32>
    %61 = vector.broadcast %8 : vector<32x1xf32> to vector<32x256xf32>
    %62 = arith.addf %60, %61 : vector<32x256xf32>
    %cst_24 = arith.constant 0.000000e+00 : f32
    %63 = vector.broadcast %cst_24 : f32 to vector<32x256xf32>
    %64 = arith.maximumf %62, %63 : vector<32x256xf32>
    %cst_25 = arith.constant dense<0.000000e+00> : vector<4x256xf32>
    %65 = tpu.matmul %2, %64, %cst_25 {dimension_numbers = #tpu.dot_dimension_numbers<[1], [0], [0], [1], [0, 0, 1, 1], [], []>, precision = #tpu.contract_precision<fp32>} : vector<4x32xf32>, vector<32x256xf32>, vector<4x256xf32> -> vector<4x256xf32>
    %66 = vector.broadcast %9 : vector<4x1xf32> to vector<4x256xf32>
    %67 = arith.addf %65, %66 : vector<4x256xf32>
    %c0_26 = arith.constant 0 : index
    %c0_27 = arith.constant 0 : index
    %68 = vector.load %arg3[%c0_26, %c0_27] : memref<4x256xf32, #tpu.memory_space<vmem>>, vector<4x256xf32>
    tpu.vector_store %arg3[%c0_26, %c0_27], %67 {strides = array<i32>} : memref<4x256xf32, #tpu.memory_space<vmem>>, vector<4x256xf32>,
    return
  }
  func.func @transform_0(%arg0: i32) -> (i32, i32) {
    %c0_i32 = arith.constant 0 : i32
    %c0_i32_0 = arith.constant 0 : i32
    return %c0_i32, %arg0 : i32, i32
  }
  func.func @transform_1(%arg0: i32) -> (i32, i32) {
    %c0_i32 = arith.constant 0 : i32
    %c0_i32_0 = arith.constant 0 : i32
    %c0_i32_1 = arith.constant 0 : i32
    return %c0_i32, %c0_i32_0 : i32, i32
  }
  func.func @transform_2(%arg0: i32) -> (i32, i32) {
    %c0_i32 = arith.constant 0 : i32
    %c0_i32_0 = arith.constant 0 : i32
    return %c0_i32, %arg0 : i32, i32
  }
}

</mosaic_0001>

<llo_original>
// kernel: tpu_custom_call.1
$region0: #{tpu_custom_call.1}
  #allocation0 [shape = 'u32[]', space=smem, size = 0x4, offset = 0x4, fixed_abs, tag = 'smem constant byte address 0x4 - core index']
  #allocation1 [shape = 'u32[72,128]{1,0:T(1,128)}', space=vmem, size = 0x9000, scoped, tag = 'internal scratch']
  %s0 = inlined_call_operand.hbm [shape: f32[16,1000], index: 0, kind: input, shape index: {}]
  %s1 = inlined_call_operand.hbm [shape: f32[32,128], index: 1, kind: input, shape index: {}]
  %s2 = inlined_call_operand.hbm [shape: f32[4,1000], index: 2, kind: output, shape index: {}]
  %s3 = sld [smem:[#allocation0]]
  $region49: #{tpu_custom_call.1} parent=0
    _
  %s5 = ssub.s32 1, %s3
  %s6 = scalar_select 0, %s5, %s3
  $region1: #{tpu_custom_call.1} parent=0
    #allocation2 [shape = 'u8[32768]{0}', space=vmem, size = 0x8000, scoped, tag = 'input window, operand 0']
    #allocation3 [shape = 's32[2]{0}', space=sflag, size = 0x8, scoped, tag = 'scoped memory for tpu_custom_call.1']
    #allocation4 [shape = 's32[2]{0}', space=sflag, size = 0x8, scoped, tag = 'scoped memory for tpu_custom_call.1']
    #allocation5 [shape = 'u8[16384]{0}', space=vmem, size = 0x4000, scoped, tag = 'input window, operand 1, single buffered']
    #allocation6 [shape = 's32[1]{0}', space=sflag, size = 0x4, scoped, tag = 'scoped memory for tpu_custom_call.1']
    #allocation7 [shape = 'u8[8192]{0}', space=vmem, size = 0x2000, scoped, tag = 'output window, operand 0']
    %7 = vsyncpa [#allocation3], 0
    %s8 = scalar_lea.sflag [#allocation3], 1
    %9 = vsyncpa %s8, 0
    %10 = vsyncpa [#allocation6], 0
    %11 = vsyncpa [#allocation4], 0
    %s12 = scalar_lea.sflag [#allocation4], 1
    %13 = vsyncpa %s12, 0
    loop: start=0, step=1, limit=6
    $region2: #{tpu_custom_call.1} parent=1 // loop_pre_header
      _
    $region3: #{tpu_custom_call.1} parent=1 // loop_header
      %s15 = sphi 0, %s19
      %p16 = scmp.ge.s32.totalorder %s15, 6
      %s25 = sphi 0, %s27
      %s28 = sphi 0, %s25
      %s29 = sphi 0, %s28
      %s45 = sphi 0, %s29
      %s49 = sphi 0, %s49
      %s51 = sphi 0, %s49
      %s52 = sphi 0, %s51
      %s66 = sphi 0, %s52
      %s72 = sphi 0, %s74
      %s75 = sphi 0, %s72
      %s76 = sphi 0, %s75
      %s92 = sphi 0, %s76
    $region4: #{tpu_custom_call.1} parent=1 // loop_header_branch
      %18 = sbr.rel (%p16) target = $region8
    $region5: #{tpu_custom_call.1} parent=1 // loop_body
      %s20 = ssub.s32 %s15, 1
      %s21 = ssub.s32 %s15, 2
      %s22 = sadd.s32 %s15, 1
      %s23 = ssub.s32 %s15, %s22
      %p24 = scmp.eq.s32.totalorder %s23, 0
      %s26 = sadd.s32 %s25, 1
      %s27 = scalar_select %p24, %s25, %s26
      %p30 = pneg %p24
      %p31 = scmp.eq.s32.totalorder %s15, 3
      %p32 = por %p30, %p31
      %p33 = scmp.ne.s32.totalorder %s25, %s28
      %p34 = scmp.eq.s32.totalorder %s15, 0
      %p35 = por %p33, %p34
      %p36 = scmp.ne.s32.totalorder %s25, %s28
      %p37 = scmp.eq.s32.totalorder %s20, 3
      %p38 = por %p36, %p37
      %p39 = scmp.ne.s32.totalorder %s28, %s29
      %p40 = scmp.eq.s32.totalorder %s20, 0
      %p41 = por %p39, %p40
      %p42 = scmp.ne.s32.totalorder %s28, %s29
      %p43 = scmp.eq.s32.totalorder %s21, 3
      %p44 = por %p42, %p43
      %p46 = scmp.ne.s32.totalorder %s29, %s45
      %p47 = scmp.eq.s32.totalorder %s21, 0
      %p48 = por %p46, %p47
      %s50 = sadd.s32 %s49, 1
      %p53 = scmp.eq.s32.totalorder %s15, 3
      %p54 = scmp.ne.s32.totalorder %s49, %s51
      %p55 = scmp.eq.s32.totalorder %s15, 0
      %p56 = por %p54, %p55
      %p57 = scmp.ne.s32.totalorder %s49, %s51
      %p58 = scmp.eq.s32.totalorder %s20, 3
      %p59 = por %p57, %p58
      %p60 = scmp.ne.s32.totalorder %s51, %s52
      %p61 = scmp.eq.s32.totalorder %s20, 0
      %p62 = por %p60, %p61
      %p63 = scmp.ne.s32.totalorder %s51, %s52
      %p64 = scmp.eq.s32.totalorder %s21, 3
      %p65 = por %p63, %p64
      %p67 = scmp.ne.s32.totalorder %s52, %s66
      %p68 = scmp.eq.s32.totalorder %s21, 0
      %p69 = por %p67, %p68
      %s70 = ssub.s32 %s15, %s22
      %p71 = scmp.eq.s32.totalorder %s70, 0
      %s73 = sadd.s32 %s72, 1
      %s74 = scalar_select %p71, %s72, %s73
      %p77 = pneg %p71
      %p78 = scmp.eq.s32.totalorder %s15, 3
      %p79 = por %p77, %p78
      %p80 = scmp.ne.s32.totalorder %s72, %s75
      %p81 = scmp.eq.s32.totalorder %s15, 0
      %p82 = por %p80, %p81
      %p83 = scmp.ne.s32.totalorder %s72, %s75
      %p84 = scmp.eq.s32.totalorder %s20, 3
      %p85 = por %p83, %p84
      %p86 = scmp.ne.s32.totalorder %s75, %s76
      %p87 = scmp.eq.s32.totalorder %s20, 0
      %p88 = por %p86, %p87
      %p89 = scmp.ne.s32.totalorder %s75, %s76
      %p90 = scmp.eq.s32.totalorder %s21, 3
      %p91 = por %p89, %p90
      %p93 = scmp.ne.s32.totalorder %s76, %s92
      %p94 = scmp.eq.s32.totalorder %s21, 0
      %p95 = por %p93, %p94
      %p96 = scmp.le.s32.totalorder 1, %s15
      %p97 = scmp.lt.s32.totalorder %s15, 5
      %p98 = pnand %p96, %p97
      %p99 = pneg %p98
      // Predicated region
      $region9: #{tpu_custom_call.1} parent=5 // pred_check
        _
      $region10: #{tpu_custom_call.1} parent=5 // pred_check_branch
        %101 = sbr.rel (%p98) target = $region12
      $region11: #{tpu_custom_call.1} parent=5 // pred_region
        %s102 = ssub.s32 %s15, 1
        // Predicated region
        $region13: #{tpu_custom_call.1} parent=11 // pred_check
          %p103 = pneg %p62
        $region14: #{tpu_custom_call.1} parent=11 // pred_check_branch
          %105 = sbr.rel (%p103) target = $region16
        $region15: #{tpu_custom_call.1} parent=11 // pred_region
          %107 = vsyncadd [#allocation6], 0
          %s108 = sshll.u32 %s1, 4
          %s109 = int_to_ptr.hbm [resolvable:$true] %s108
          %s110 = sshll.u32 [#allocation5], 4
          %s111 = int_to_ptr.vmem [resolvable:$true] %s110
          %116 = dma.hbm_to_vmem [thread:$0]  %s109, 512, %s111, [#allocation6], 128, 128, 8
        $region16: #{tpu_custom_call.1} parent=11 // pred_fallthru
          _
      $region12: #{tpu_custom_call.1} parent=5 // pred_fallthru
        _
      %p117 = scmp.lt.s32.totalorder %s15, 4
      // Predicated region
      $region17: #{tpu_custom_call.1} parent=5 // pred_check
        %p118 = pneg %p117
      $region18: #{tpu_custom_call.1} parent=5 // pred_check_branch
        %120 = sbr.rel (%p118) target = $region20
      $region19: #{tpu_custom_call.1} parent=5 // pred_region
        // Predicated region
        $region21: #{tpu_custom_call.1} parent=19 // pred_check
          %p121 = pneg %p35
        $region22: #{tpu_custom_call.1} parent=19 // pred_check_branch
          %123 = sbr.rel (%p121) target = $region24
        $region23: #{tpu_custom_call.1} parent=19 // pred_region
          %s124 = sand.u32 %s25, 1
          %s125 = scalar_lea.sflag [#allocation3], %s124
          %s126 = sand.u32 %s25, 1
          %s127 = smul.addr %s126, 32
          %s128 = scalar_lea.vmem [#allocation2], %s127
          %s129 = smul.u32 2, %s15
          %131 = vsyncadd %s125, 0
          %s132 = smul.addr %s129, 8
          %s133 = scalar_lea.hbm %s0, %s132
          %s134 = sshll.u32 %s133, 4
          %s135 = int_to_ptr.hbm [resolvable:$true] %s134
          %s136 = sshll.u32 %s128, 4
          %s137 = int_to_ptr.vmem [resolvable:$true] %s136
          %142 = dma.hbm_to_vmem [thread:$0]  %s135, 512, %s137, %s125, 1024, 256, 16
        $region24: #{tpu_custom_call.1} parent=19 // pred_fallthru
          _
      $region20: #{tpu_custom_call.1} parent=5 // pred_fallthru
        _
      %p143 = scmp.le.s32.totalorder 1, %s15
      %p144 = scmp.lt.s32.totalorder %s15, 5
      %p145 = pnand %p143, %p144
      %p146 = pneg %p145
      // Predicated region
      $region25: #{tpu_custom_call.1} parent=5 // pred_check
        _
      $region26: #{tpu_custom_call.1} parent=5 // pred_check_branch
        %148 = sbr.rel (%p145) target = $region28
      $region27: #{tpu_custom_call.1} parent=5 // pred_region
        %s149 = ssub.s32 %s15, 1
        %s150 = sand.u32 %s28, 1
        %s151 = scalar_lea.sflag [#allocation3], %s150
        %s152 = sand.u32 %s28, 1
        %s153 = smul.addr %s152, 32
        %s154 = scalar_lea.vmem [#allocation2], %s153
        // Predicated region
        $region29: #{tpu_custom_call.1} parent=27 // pred_check
          %p155 = pneg %p41
        $region30: #{tpu_custom_call.1} parent=27 // pred_check_branch
          %157 = sbr.rel (%p155) target = $region32
        $region31: #{tpu_custom_call.1} parent=27 // pred_region
          %159 = dma.done %s151, 512
        $region32: #{tpu_custom_call.1} parent=27 // pred_fallthru
          _
        // Predicated region
        $region33: #{tpu_custom_call.1} parent=27 // pred_check
          %p160 = pneg %p62
        $region34: #{tpu_custom_call.1} parent=27 // pred_check_branch
          %162 = sbr.rel (%p160) target = $region36
        $region35: #{tpu_custom_call.1} parent=27 // pred_region
          %164 = dma.done [#allocation6], 512
        $region36: #{tpu_custom_call.1} parent=27 // pred_fallthru
          _
        %s165 = sand.u32 %s28, 1
        %s166 = scalar_lea.sflag [#allocation3], %s165
        %s167 = sand.u32 %s28, 1
        %s168 = smul.addr %s167, 32
        %s169 = scalar_lea.vmem [#allocation2], %s168
        %p170 = pneg %p41
        %p171 = pneg %p38
        %p172 = pneg %p62
        %p173 = pneg %p59
        %p174 = pneg %p88
        %p175 = pneg %p85
        %s176 = sand.u32 %s75, 1
        %s177 = scalar_lea.sflag [#allocation4], %s176
        %s178 = sand.u32 %s75, 1
        %s179 = smul.addr %s178, 8
        %s180 = scalar_lea.vmem [#allocation7], %s179
        %s181 = smul.u32 2, %s20
        %s182 = smul.u32 2, %s20
        %v183 = vld [vmem:[#allocation5] sm:$0xff]
        %v184 = vld [vmem:[#allocation5 + $0x8] sm:$0xff]
        %v185 = vld [vmem:[#allocation5 + $0x10] sm:$0xff]
        %v186 = vld [vmem:[#allocation5 + $0x18] sm:$0xff]
        %v187 = vld [vmem:[#allocation5] sm:$0xf]
        %v188 = vld [vmem:[%s154] sm:$0xff]
        %v189 = vld [vmem:[%s154 + $0x8] sm:$0xff]
        %v190 = vld [vmem:[%s154 + $0x10] sm:$0xff]
        %v191 = vld [vmem:[%s154 + $0x18] sm:$0xff]
        %193 = vset.pattern.permute.xlu0 80
        %194 = vperm.xlu0 %193, %v183
        %v195 = vpop.permute.xlu0 %194
        %198 = vset.pattern.permute.xlu0 80
        %199 = vperm.xlu0 %198, %v184
        %v200 = vpop.permute.xlu0 %199
        %203 = vset.pattern.permute.xlu0 80
        %204 = vperm.xlu0 %203, %v185
        %v205 = vpop.permute.xlu0 %204
        %208 = vset.pattern.permute.xlu0 80
        %209 = vperm.xlu0 %208, %v186
        %v210 = vpop.permute.xlu0 %209
        %vm212 = vcmask 130048
        %v213 = vsel %vm212, %v183, 0
        %v215 = vsel %vm212, %v184, 0
        %v217 = vsel %vm212, %v185, 0
        %v219 = vsel %vm212, %v186, 0
        %221 = vmatpush.msra.mxu0 0.0
        %222 = vmatpush.msra.mxu0 0.0
        %223 = vmatpush.msra.mxu0 0.0
        %224 = vmatpush.msra.mxu0 0.0
        %225 = vmatpush.msra.mxu0 0.0
        %226 = vmatpush.msra.mxu0 0.0
        %227 = vmatpush.msra.mxu0 0.0
        %228 = vmatpush.msra.mxu0 0.0
        %229 = vmatpush.msra.mxu0 0.0
        %230 = vmatpush.msra.mxu0 0.0
        %231 = vmatpush.msra.mxu0 0.0
        %232 = vmatpush.msra.mxu0 0.0
        %233 = vmatpush.msra.mxu0 0.0
        %234 = vmatpush.msra.mxu0 0.0
        %v235 = vand.u32 %v190, 4294901760
        %236 = vmatpush.msra.mxu0 %v235
        %v237 = vand.u32 %v188, 4294901760
        %238 = vmatpush.msra.mxu0 %v237
        %v239 = vand.u32 %v213, 4294901760
        %v240 = vsub.f32 %v213, %v239
        %v241 = vand.u32 %v240, 4294901760
        %v242 = vsub.f32 %v240, %v241
        %v243 = vand.u32 %v242, 4294901760
        %244 = vmatmul.f32.gmra.mxu0 %v243
        %v245 = vpop.f32.mrf.mxu0
        %v246 = vadd.f32 %v195, %v245
        %v247 = vand.u32 %v215, 4294901760
        %v248 = vsub.f32 %v215, %v247
        %v249 = vand.u32 %v248, 4294901760
        %v250 = vsub.f32 %v248, %v249
        %v251 = vand.u32 %v250, 4294901760
        %252 = vmatmul.f32.gmra.mxu0 %v251
        %v253 = vpop.f32.mrf.mxu0
        %v254 = vadd.f32 %v200, %v253
        %v255 = vand.u32 %v217, 4294901760
        %v256 = vsub.f32 %v217, %v255
        %v257 = vand.u32 %v256, 4294901760
        %v258 = vsub.f32 %v256, %v257
        %v259 = vand.u32 %v258, 4294901760
        %260 = vmatmul.f32.gmra.mxu0 %v259
        %v261 = vpop.f32.mrf.mxu0
        %v262 = vadd.f32 %v205, %v261
        %v263 = vand.u32 %v219, 4294901760
        %v264 = vsub.f32 %v219, %v263
        %v265 = vand.u32 %v264, 4294901760
        %v266 = vsub.f32 %v264, %v265
        %v267 = vand.u32 %v266, 4294901760
        %268 = vmatmul.f32.gmra.mxu0 %v267
        %v269 = vpop.f32.mrf.mxu0
        %v270 = vadd.f32 %v210, %v269
        %271 = vdwg.mxu0
        %272 = vmatpush.msra.mxu0 0.0
        %273 = vmatpush.msra.mxu0 0.0
        %274 = vmatpush.msra.mxu0 0.0
        %275 = vmatpush.msra.mxu0 0.0
        %276 = vmatpush.msra.mxu0 0.0
        %277 = vmatpush.msra.mxu0 0.0
        %278 = vmatpush.msra.mxu0 0.0
        %279 = vmatpush.msra.mxu0 0.0
        %280 = vmatpush.msra.mxu0 0.0
        %281 = vmatpush.msra.mxu0 0.0
        %282 = vmatpush.msra.mxu0 0.0
        %283 = vmatpush.msra.mxu0 0.0
        %284 = vmatpush.msra.mxu0 0.0
        %285 = vmatpush.msra.mxu0 0.0
        %v286 = vand.u32 %v190, 4294901760
        %v287 = vsub.f32 %v190, %v286
        %v288 = vand.u32 %v287, 4294901760
        %v289 = vsub.f32 %v287, %v288
        %v290 = vand.u32 %v289, 4294901760
        %291 = vmatpush.msra.mxu0 %v290
        %v292 = vand.u32 %v188, 4294901760
        %v293 = vsub.f32 %v188, %v292
        %v294 = vand.u32 %v293, 4294901760
        %v295 = vsub.f32 %v293, %v294
        %v296 = vand.u32 %v295, 4294901760
        %297 = vmatpush.msra.mxu0 %v296
        %v298 = vand.u32 %v213, 4294901760
        %299 = vmatmul.f32.gmra.mxu0 %v298
        %v300 = vpop.f32.mrf.mxu0
        %v301 = vadd.f32 %v246, %v300
        %v302 = vand.u32 %v215, 4294901760
        %303 = vmatmul.f32.gmra.mxu0 %v302
        %v304 = vpop.f32.mrf.mxu0
        %v305 = vadd.f32 %v254, %v304
        %v306 = vand.u32 %v217, 4294901760
        %307 = vmatmul.f32.gmra.mxu0 %v306
        %v308 = vpop.f32.mrf.mxu0
        %v309 = vadd.f32 %v262, %v308
        %v310 = vand.u32 %v219, 4294901760
        %311 = vmatmul.f32.gmra.mxu0 %v310
        %v312 = vpop.f32.mrf.mxu0
        %v313 = vadd.f32 %v270, %v312
        %314 = vdwg.mxu0
        %315 = vmatpush.msra.mxu0 0.0
        %316 = vmatpush.msra.mxu0 0.0
        %317 = vmatpush.msra.mxu0 0.0
        %318 = vmatpush.msra.mxu0 0.0
        %319 = vmatpush.msra.mxu0 0.0
        %320 = vmatpush.msra.mxu0 0.0
        %321 = vmatpush.msra.mxu0 0.0
        %322 = vmatpush.msra.mxu0 0.0
        %323 = vmatpush.msra.mxu0 0.0
        %324 = vmatpush.msra.mxu0 0.0
        %325 = vmatpush.msra.mxu0 0.0
        %326 = vmatpush.msra.mxu0 0.0
        %327 = vmatpush.msra.mxu0 0.0
        %328 = vmatpush.msra.mxu0 0.0
        %v329 = vand.u32 %v190, 4294901760
        %v330 = vsub.f32 %v190, %v329
        %331 = vmatpush.msra.mxu0 %v330
        %v332 = vand.u32 %v188, 4294901760
        %v333 = vsub.f32 %v188, %v332
        %334 = vmatpush.msra.mxu0 %v333
        %v335 = vand.u32 %v213, 4294901760
        %v336 = vsub.f32 %v213, %v335
        %337 = vmatmul.f32.gmra.mxu0 %v336
        %v338 = vpop.f32.mrf.mxu0
        %v339 = vadd.f32 %v301, %v338
        %v340 = vand.u32 %v215, 4294901760
        %v341 = vsub.f32 %v215, %v340
        %342 = vmatmul.f32.gmra.mxu0 %v341
        %v343 = vpop.f32.mrf.mxu0
        %v344 = vadd.f32 %v305, %v343
        %v345 = vand.u32 %v217, 4294901760
        %v346 = vsub.f32 %v217, %v345
        %347 = vmatmul.f32.gmra.mxu0 %v346
        %v348 = vpop.f32.mrf.mxu0
        %v349 = vadd.f32 %v309, %v348
        %v350 = vand.u32 %v219, 4294901760
        %v351 = vsub.f32 %v219, %v350
        %352 = vmatmul.f32.gmra.mxu0 %v351
        %v353 = vpop.f32.mrf.mxu0
        %v354 = vadd.f32 %v313, %v353
        %355 = vdwg.mxu0
        %356 = vmatpush.msra.mxu0 0.0
        %357 = vmatpush.msra.mxu0 0.0
        %358 = vmatpush.msra.mxu0 0.0
        %359 = vmatpush.msra.mxu0 0.0
        %360 = vmatpush.msra.mxu0 0.0
        %361 = vmatpush.msra.mxu0 0.0
        %362 = vmatpush.msra.mxu0 0.0
        %363 = vmatpush.msra.mxu0 0.0
        %364 = vmatpush.msra.mxu0 0.0
        %365 = vmatpush.msra.mxu0 0.0
        %366 = vmatpush.msra.mxu0 0.0
        %367 = vmatpush.msra.mxu0 0.0
        %368 = vmatpush.msra.mxu0 0.0
        %369 = vmatpush.msra.mxu0 0.0
        %v370 = vand.u32 %v190, 4294901760
        %371 = vmatpush.msra.mxu0 %v370
        %v372 = vand.u32 %v188, 4294901760
        %373 = vmatpush.msra.mxu0 %v372
        %v374 = vand.u32 %v213, 4294901760
        %v375 = vsub.f32 %v213, %v374
        %v376 = vand.u32 %v375, 4294901760
        %377 = vmatmul.f32.gmra.mxu0 %v376
        %v378 = vpop.f32.mrf.mxu0
        %v379 = vadd.f32 %v339, %v378
        %v380 = vand.u32 %v215, 4294901760
        %v381 = vsub.f32 %v215, %v380
        %v382 = vand.u32 %v381, 4294901760
        %383 = vmatmul.f32.gmra.mxu0 %v382
        %v384 = vpop.f32.mrf.mxu0
        %v385 = vadd.f32 %v344, %v384
        %v386 = vand.u32 %v217, 4294901760
        %v387 = vsub.f32 %v217, %v386
        %v388 = vand.u32 %v387, 4294901760
        %389 = vmatmul.f32.gmra.mxu0 %v388
        %v390 = vpop.f32.mrf.mxu0
        %v391 = vadd.f32 %v349, %v390
        %v392 = vand.u32 %v219, 4294901760
        %v393 = vsub.f32 %v219, %v392
        %v394 = vand.u32 %v393, 4294901760
        %395 = vmatmul.f32.gmra.mxu0 %v394
        %v396 = vpop.f32.mrf.mxu0
        %v397 = vadd.f32 %v354, %v396
        %398 = vdwg.mxu0
        %399 = vmatpush.msra.mxu0 0.0
        %400 = vmatpush.msra.mxu0 0.0
        %401 = vmatpush.msra.mxu0 0.0
        %402 = vmatpush.msra.mxu0 0.0
        %403 = vmatpush.msra.mxu0 0.0
        %404 = vmatpush.msra.mxu0 0.0
        %405 = vmatpush.msra.mxu0 0.0
        %406 = vmatpush.msra.mxu0 0.0
        %407 = vmatpush.msra.mxu0 0.0
        %408 = vmatpush.msra.mxu0 0.0
        %409 = vmatpush.msra.mxu0 0.0
        %410 = vmatpush.msra.mxu0 0.0
        %411 = vmatpush.msra.mxu0 0.0
        %412 = vmatpush.msra.mxu0 0.0
        %v413 = vand.u32 %v190, 4294901760
        %v414 = vsub.f32 %v190, %v413
        %v415 = vand.u32 %v414, 4294901760
        %416 = vmatpush.msra.mxu0 %v415
        %v417 = vand.u32 %v188, 4294901760
        %v418 = vsub.f32 %v188, %v417
        %v419 = vand.u32 %v418, 4294901760
        %420 = vmatpush.msra.mxu0 %v419
        %v421 = vand.u32 %v213, 4294901760
        %422 = vmatmul.f32.gmra.mxu0 %v421
        %v423 = vpop.f32.mrf.mxu0
        %v424 = vadd.f32 %v379, %v423
        %v425 = vand.u32 %v215, 4294901760
        %426 = vmatmul.f32.gmra.mxu0 %v425
        %v427 = vpop.f32.mrf.mxu0
        %v428 = vadd.f32 %v385, %v427
        %v429 = vand.u32 %v217, 4294901760
        %430 = vmatmul.f32.gmra.mxu0 %v429
        %v431 = vpop.f32.mrf.mxu0
        %v432 = vadd.f32 %v391, %v431
        %v433 = vand.u32 %v219, 4294901760
        %434 = vmatmul.f32.gmra.mxu0 %v433
        %v435 = vpop.f32.mrf.mxu0
        %v436 = vadd.f32 %v397, %v435
        %437 = vdwg.mxu0
        %438 = vmatpush.msra.mxu0 0.0
        %439 = vmatpush.msra.mxu0 0.0
        %440 = vmatpush.msra.mxu0 0.0
        %441 = vmatpush.msra.mxu0 0.0
        %442 = vmatpush.msra.mxu0 0.0
        %443 = vmatpush.msra.mxu0 0.0
        %444 = vmatpush.msra.mxu0 0.0
        %445 = vmatpush.msra.mxu0 0.0
        %446 = vmatpush.msra.mxu0 0.0
        %447 = vmatpush.msra.mxu0 0.0
        %448 = vmatpush.msra.mxu0 0.0
        %449 = vmatpush.msra.mxu0 0.0
        %450 = vmatpush.msra.mxu0 0.0
        %451 = vmatpush.msra.mxu0 0.0
        %v452 = vand.u32 %v190, 4294901760
        %453 = vmatpush.msra.mxu0 %v452
        %v454 = vand.u32 %v188, 4294901760
        %455 = vmatpush.msra.mxu0 %v454
        %v456 = vand.u32 %v213, 4294901760
        %457 = vmatmul.f32.gmra.mxu0 %v456
        %v458 = vpop.f32.mrf.mxu0
        %v459 = vadd.f32 %v424, %v458
        %v460 = vand.u32 %v215, 4294901760
        %461 = vmatmul.f32.gmra.mxu0 %v460
        %v462 = vpop.f32.mrf.mxu0
        %v463 = vadd.f32 %v428, %v462
        %v464 = vand.u32 %v217, 4294901760
        %465 = vmatmul.f32.gmra.mxu0 %v464
        %v466 = vpop.f32.mrf.mxu0
        %v467 = vadd.f32 %v432, %v466
        %v468 = vand.u32 %v219, 4294901760
        %469 = vmatmul.f32.gmra.mxu0 %v468
        %v470 = vpop.f32.mrf.mxu0
        %v471 = vadd.f32 %v436, %v470
        %472 = vdwg.mxu0
        %473 = vmatpush.msra.mxu0 0.0
        %474 = vmatpush.msra.mxu0 0.0
        %475 = vmatpush.msra.mxu0 0.0
        %476 = vmatpush.msra.mxu0 0.0
        %477 = vmatpush.msra.mxu0 0.0
        %478 = vmatpush.msra.mxu0 0.0
        %479 = vmatpush.msra.mxu0 0.0
        %480 = vmatpush.msra.mxu0 0.0
        %481 = vmatpush.msra.mxu0 0.0
        %482 = vmatpush.msra.mxu0 0.0
        %483 = vmatpush.msra.mxu0 0.0
        %484 = vmatpush.msra.mxu0 0.0
        %485 = vmatpush.msra.mxu0 0.0
        %486 = vmatpush.msra.mxu0 0.0
        %v487 = vand.u32 %v191, 4294901760
        %488 = vmatpush.msra.mxu0 %v487
        %v489 = vand.u32 %v189, 4294901760
        %490 = vmatpush.msra.mxu0 %v489
        %v491 = vand.u32 %v213, 4294901760
        %v492 = vsub.f32 %v213, %v491
        %v493 = vand.u32 %v492, 4294901760
        %v494 = vsub.f32 %v492, %v493
        %v495 = vand.u32 %v494, 4294901760
        %496 = vmatmul.f32.gmra.mxu0 %v495
        %v497 = vpop.f32.mrf.mxu0
        %v498 = vadd.f32 %v195, %v497
        %v499 = vand.u32 %v215, 4294901760
        %v500 = vsub.f32 %v215, %v499
        %v501 = vand.u32 %v500, 4294901760
        %v502 = vsub.f32 %v500, %v501
        %v503 = vand.u32 %v502, 4294901760
        %504 = vmatmul.f32.gmra.mxu0 %v503
        %v505 = vpop.f32.mrf.mxu0
        %v506 = vadd.f32 %v200, %v505
        %v507 = vand.u32 %v217, 4294901760
        %v508 = vsub.f32 %v217, %v507
        %v509 = vand.u32 %v508, 4294901760
        %v510 = vsub.f32 %v508, %v509
        %v511 = vand.u32 %v510, 4294901760
        %512 = vmatmul.f32.gmra.mxu0 %v511
        %v513 = vpop.f32.mrf.mxu0
        %v514 = vadd.f32 %v205, %v513
        %v515 = vand.u32 %v219, 4294901760
        %v516 = vsub.f32 %v219, %v515
        %v517 = vand.u32 %v516, 4294901760
        %v518 = vsub.f32 %v516, %v517
        %v519 = vand.u32 %v518, 4294901760
        %520 = vmatmul.f32.gmra.mxu0 %v519
        %v521 = vpop.f32.mrf.mxu0
        %v522 = vadd.f32 %v210, %v521
        %523 = vdwg.mxu0
        %524 = vmatpush.msra.mxu0 0.0
        %525 = vmatpush.msra.mxu0 0.0
        %526 = vmatpush.msra.mxu0 0.0
        %527 = vmatpush.msra.mxu0 0.0
        %528 = vmatpush.msra.mxu0 0.0
        %529 = vmatpush.msra.mxu0 0.0
        %530 = vmatpush.msra.mxu0 0.0
        %531 = vmatpush.msra.mxu0 0.0
        %532 = vmatpush.msra.mxu0 0.0
        %533 = vmatpush.msra.mxu0 0.0
        %534 = vmatpush.msra.mxu0 0.0
        %535 = vmatpush.msra.mxu0 0.0
        %536 = vmatpush.msra.mxu0 0.0
        %537 = vmatpush.msra.mxu0 0.0
        %v538 = vand.u32 %v191, 4294901760
        %v539 = vsub.f32 %v191, %v538
        %v540 = vand.u32 %v539, 4294901760
        %v541 = vsub.f32 %v539, %v540
        %v542 = vand.u32 %v541, 4294901760
        %543 = vmatpush.msra.mxu0 %v542
        %v544 = vand.u32 %v189, 4294901760
        %v545 = vsub.f32 %v189, %v544
        %v546 = vand.u32 %v545, 4294901760
        %v547 = vsub.f32 %v545, %v546
        %v548 = vand.u32 %v547, 4294901760
        %549 = vmatpush.msra.mxu0 %v548
        %v550 = vand.u32 %v213, 4294901760
        %551 = vmatmul.f32.gmra.mxu0 %v550
        %v552 = vpop.f32.mrf.mxu0
        %v553 = vadd.f32 %v498, %v552
        %v554 = vand.u32 %v215, 4294901760
        %555 = vmatmul.f32.gmra.mxu0 %v554
        %v556 = vpop.f32.mrf.mxu0
        %v557 = vadd.f32 %v506, %v556
        %v558 = vand.u32 %v217, 4294901760
        %559 = vmatmul.f32.gmra.mxu0 %v558
        %v560 = vpop.f32.mrf.mxu0
        %v561 = vadd.f32 %v514, %v560
        %v562 = vand.u32 %v219, 4294901760
        %563 = vmatmul.f32.gmra.mxu0 %v562
        %v564 = vpop.f32.mrf.mxu0
        %v565 = vadd.f32 %v522, %v564
        %566 = vdwg.mxu0
        %567 = vmatpush.msra.mxu0 0.0
        %568 = vmatpush.msra.mxu0 0.0
        %569 = vmatpush.msra.mxu0 0.0
        %570 = vmatpush.msra.mxu0 0.0
        %571 = vmatpush.msra.mxu0 0.0
        %572 = vmatpush.msra.mxu0 0.0
        %573 = vmatpush.msra.mxu0 0.0
        %574 = vmatpush.msra.mxu0 0.0
        %575 = vmatpush.msra.mxu0 0.0
        %576 = vmatpush.msra.mxu0 0.0
        %577 = vmatpush.msra.mxu0 0.0
        %578 = vmatpush.msra.mxu0 0.0
        %579 = vmatpush.msra.mxu0 0.0
        %580 = vmatpush.msra.mxu0 0.0
        %v581 = vand.u32 %v191, 4294901760
        %v582 = vsub.f32 %v191, %v581
        %583 = vmatpush.msra.mxu0 %v582
        %v584 = vand.u32 %v189, 4294901760
        %v585 = vsub.f32 %v189, %v584
        %586 = vmatpush.msra.mxu0 %v585
        %v587 = vand.u32 %v213, 4294901760
        %v588 = vsub.f32 %v213, %v587
        %589 = vmatmul.f32.gmra.mxu0 %v588
        %v590 = vpop.f32.mrf.mxu0
        %v591 = vadd.f32 %v553, %v590
        %v592 = vand.u32 %v215, 4294901760
        %v593 = vsub.f32 %v215, %v592
        %594 = vmatmul.f32.gmra.mxu0 %v593
        %v595 = vpop.f32.mrf.mxu0
        %v596 = vadd.f32 %v557, %v595
        %v597 = vand.u32 %v217, 4294901760
        %v598 = vsub.f32 %v217, %v597
        %599 = vmatmul.f32.gmra.mxu0 %v598
        %v600 = vpop.f32.mrf.mxu0
        %v601 = vadd.f32 %v561, %v600
        %v602 = vand.u32 %v219, 4294901760
        %v603 = vsub.f32 %v219, %v602
        %604 = vmatmul.f32.gmra.mxu0 %v603
        %v605 = vpop.f32.mrf.mxu0
        %v606 = vadd.f32 %v565, %v605
        %607 = vdwg.mxu0
        %608 = vmatpush.msra.mxu0 0.0
        %609 = vmatpush.msra.mxu0 0.0
        %610 = vmatpush.msra.mxu0 0.0
        %611 = vmatpush.msra.mxu0 0.0
        %612 = vmatpush.msra.mxu0 0.0
        %613 = vmatpush.msra.mxu0 0.0
        %614 = vmatpush.msra.mxu0 0.0
        %615 = vmatpush.msra.mxu0 0.0
        %616 = vmatpush.msra.mxu0 0.0
        %617 = vmatpush.msra.mxu0 0.0
        %618 = vmatpush.msra.mxu0 0.0
        %619 = vmatpush.msra.mxu0 0.0
        %620 = vmatpush.msra.mxu0 0.0
        %621 = vmatpush.msra.mxu0 0.0
        %v622 = vand.u32 %v191, 4294901760
        %623 = vmatpush.msra.mxu0 %v622
        %v624 = vand.u32 %v189, 4294901760
        %625 = vmatpush.msra.mxu0 %v624
        %v626 = vand.u32 %v213, 4294901760
        %v627 = vsub.f32 %v213, %v626
        %v628 = vand.u32 %v627, 4294901760
        %629 = vmatmul.f32.gmra.mxu0 %v628
        %v630 = vpop.f32.mrf.mxu0
        %v631 = vadd.f32 %v591, %v630
        %v632 = vand.u32 %v215, 4294901760
        %v633 = vsub.f32 %v215, %v632
        %v634 = vand.u32 %v633, 4294901760
        %635 = vmatmul.f32.gmra.mxu0 %v634
        %v636 = vpop.f32.mrf.mxu0
        %v637 = vadd.f32 %v596, %v636
        %v638 = vand.u32 %v217, 4294901760
        %v639 = vsub.f32 %v217, %v638
        %v640 = vand.u32 %v639, 4294901760
        %641 = vmatmul.f32.gmra.mxu0 %v640
        %v642 = vpop.f32.mrf.mxu0
        %v643 = vadd.f32 %v601, %v642
        %v644 = vand.u32 %v219, 4294901760
        %v645 = vsub.f32 %v219, %v644
        %v646 = vand.u32 %v645, 4294901760
        %647 = vmatmul.f32.gmra.mxu0 %v646
        %v648 = vpop.f32.mrf.mxu0
        %v649 = vadd.f32 %v606, %v648
        %650 = vdwg.mxu0
        %651 = vmatpush.msra.mxu0 0.0
        %652 = vmatpush.msra.mxu0 0.0
        %653 = vmatpush.msra.mxu0 0.0
        %654 = vmatpush.msra.mxu0 0.0
        %655 = vmatpush.msra.mxu0 0.0
        %656 = vmatpush.msra.mxu0 0.0
        %657 = vmatpush.msra.mxu0 0.0
        %658 = vmatpush.msra.mxu0 0.0
        %659 = vmatpush.msra.mxu0 0.0
        %660 = vmatpush.msra.mxu0 0.0
        %661 = vmatpush.msra.mxu0 0.0
        %662 = vmatpush.msra.mxu0 0.0
        %663 = vmatpush.msra.mxu0 0.0
        %664 = vmatpush.msra.mxu0 0.0
        %v665 = vand.u32 %v191, 4294901760
        %v666 = vsub.f32 %v191, %v665
        %v667 = vand.u32 %v666, 4294901760
        %668 = vmatpush.msra.mxu0 %v667
        %v669 = vand.u32 %v189, 4294901760
        %v670 = vsub.f32 %v189, %v669
        %v671 = vand.u32 %v670, 4294901760
        %672 = vmatpush.msra.mxu0 %v671
        %v673 = vand.u32 %v213, 4294901760
        %674 = vmatmul.f32.gmra.mxu0 %v673
        %v675 = vpop.f32.mrf.mxu0
        %v676 = vadd.f32 %v631, %v675
        %v677 = vand.u32 %v215, 4294901760
        %678 = vmatmul.f32.gmra.mxu0 %v677
        %v679 = vpop.f32.mrf.mxu0
        %v680 = vadd.f32 %v637, %v679
        %v681 = vand.u32 %v217, 4294901760
        %682 = vmatmul.f32.gmra.mxu0 %v681
        %v683 = vpop.f32.mrf.mxu0
        %v684 = vadd.f32 %v643, %v683
        %v685 = vand.u32 %v219, 4294901760
        %686 = vmatmul.f32.gmra.mxu0 %v685
        %v687 = vpop.f32.mrf.mxu0
        %v688 = vadd.f32 %v649, %v687
        %689 = vdwg.mxu0
        %690 = vmatpush.msra.mxu0 0.0
        %691 = vmatpush.msra.mxu0 0.0
        %692 = vmatpush.msra.mxu0 0.0
        %693 = vmatpush.msra.mxu0 0.0
        %694 = vmatpush.msra.mxu0 0.0
        %695 = vmatpush.msra.mxu0 0.0
        %696 = vmatpush.msra.mxu0 0.0
        %697 = vmatpush.msra.mxu0 0.0
        %698 = vmatpush.msra.mxu0 0.0
        %699 = vmatpush.msra.mxu0 0.0
        %700 = vmatpush.msra.mxu0 0.0
        %701 = vmatpush.msra.mxu0 0.0
        %702 = vmatpush.msra.mxu0 0.0
        %703 = vmatpush.msra.mxu0 0.0
        %v704 = vand.u32 %v191, 4294901760
        %705 = vmatpush.msra.mxu0 %v704
        %v706 = vand.u32 %v189, 4294901760
        %707 = vmatpush.msra.mxu0 %v706
        %v708 = vand.u32 %v213, 4294901760
        %709 = vmatmul.f32.gmra.mxu0 %v708
        %v710 = vpop.f32.mrf.mxu0
        %v711 = vadd.f32 %v676, %v710
        %v712 = vand.u32 %v215, 4294901760
        %713 = vmatmul.f32.gmra.mxu0 %v712
        %v714 = vpop.f32.mrf.mxu0
        %v715 = vadd.f32 %v680, %v714
        %v716 = vand.u32 %v217, 4294901760
        %717 = vmatmul.f32.gmra.mxu0 %v716
        %v718 = vpop.f32.mrf.mxu0
        %v719 = vadd.f32 %v684, %v718
        %v720 = vand.u32 %v219, 4294901760
        %721 = vmatmul.f32.gmra.mxu0 %v720
        %v722 = vpop.f32.mrf.mxu0
        %v723 = vadd.f32 %v688, %v722
        %724 = vdwg.mxu0
        %v725 = vadd.f32 %v459, %v463
        %v726 = vadd.f32 %v725, %v467
        %v727 = vadd.f32 %v726, %v471
        %v728 = vrot.slane %v727, 4
        %v729 = vadd.f32 %v727, %v728
        %v730 = vrot.slane %v729, 2
        %v731 = vadd.f32 %v729, %v730
        %v732 = vrot.slane %v731, 1
        %v733 = vadd.f32 %v731, %v732
        %v734 = vadd.f32 %v711, %v715
        %v735 = vadd.f32 %v734, %v719
        %v736 = vadd.f32 %v735, %v723
        %v737 = vrot.slane %v736, 4
        %v738 = vadd.f32 %v736, %v737
        %v739 = vrot.slane %v738, 2
        %v740 = vadd.f32 %v738, %v739
        %v741 = vrot.slane %v740, 1
        %v742 = vadd.f32 %v740, %v741
        %v743 = vrcp.pop 32.0
        %v744 = vmul.f32 32.0, %v743
        %v745 = vsub.f32 1.0, %v744
        %v746 = vmul.f32 %v743, %v745
        %v747 = vadd.f32 %v743, %v746
        %vm748 = vweird.f32 %v743
        %v749 = vsel %vm748, %v743, %v747
        %v750 = vmul.f32 %v733, %v749
        %v751 = vmul.f32 %v742, %v749
        %v752 = vsub.f32 %v459, %v750
        %v753 = vsub.f32 %v711, %v751
        %v754 = vsub.f32 %v463, %v750
        %v755 = vsub.f32 %v715, %v751
        %v756 = vsub.f32 %v467, %v750
        %v757 = vsub.f32 %v719, %v751
        %v758 = vsub.f32 %v471, %v750
        %v759 = vsub.f32 %v723, %v751
        %v760 = vmul.f32 %v752, %v752
        %v761 = vmul.f32 %v753, %v753
        %v762 = vmul.f32 %v754, %v754
        %v763 = vmul.f32 %v755, %v755
        %v764 = vmul.f32 %v756, %v756
        %v765 = vmul.f32 %v757, %v757
        %v766 = vmul.f32 %v758, %v758
        %v767 = vmul.f32 %v759, %v759
        %v768 = vadd.f32 %v760, %v762
        %v769 = vadd.f32 %v768, %v764
        %v770 = vadd.f32 %v769, %v766
        %v771 = vrot.slane %v770, 4
        %v772 = vadd.f32 %v770, %v771
        %v773 = vrot.slane %v772, 2
        %v774 = vadd.f32 %v772, %v773
        %v775 = vrot.slane %v774, 1
        %v776 = vadd.f32 %v774, %v775
        %v777 = vadd.f32 %v761, %v763
        %v778 = vadd.f32 %v777, %v765
        %v779 = vadd.f32 %v778, %v767
        %v780 = vrot.slane %v779, 4
        %v781 = vadd.f32 %v779, %v780
        %v782 = vrot.slane %v781, 2
        %v783 = vadd.f32 %v781, %v782
        %v784 = vrot.slane %v783, 1
        %v785 = vadd.f32 %v783, %v784
        %v786 = vmul.f32 %v776, %v749
        %v787 = vmul.f32 %v785, %v749
        %v788 = vadd.f32 %v786, 1e-05
        %v789 = vadd.f32 %v787, 1e-05
        %v790 = vrsqrt.pop %v788
        %v791 = vmul.f32 %v790, %v788
        %v792 = vmul.f32 %v791, %v790
        %v793 = vmul.f32 0.5, %v792
        %v794 = vsub.f32 1.5, %v793
        %v795 = vmul.f32 %v790, %v794
        %vm796 = vweird.f32 %v788
        %vm797 = vweird.f32 %v790
        %vm798 = vmor %vm796, %vm797
        %v799 = vsel %vm798, %v790, %v795
        %v800 = vrsqrt.pop %v789
        %v801 = vmul.f32 %v800, %v789
        %v802 = vmul.f32 %v801, %v800
        %v803 = vmul.f32 0.5, %v802
        %v804 = vsub.f32 1.5, %v803
        %v805 = vmul.f32 %v800, %v804
        %vm806 = vweird.f32 %v789
        %vm807 = vweird.f32 %v800
        %vm808 = vmor %vm806, %vm807
        %v809 = vsel %vm808, %v800, %v805
        %v810 = vmul.f32 %v752, %v799
        %v811 = vmul.f32 %v753, %v809
        %v812 = vmul.f32 %v754, %v799
        %v813 = vmul.f32 %v755, %v809
        %v814 = vmul.f32 %v756, %v799
        %v815 = vmul.f32 %v757, %v809
        %v816 = vmul.f32 %v758, %v799
        %v817 = vmul.f32 %v759, %v809
        %818 = vset.pattern.permute.xlu0 81
        %819 = vperm.xlu0 %818, %v183
        %v820 = vpop.permute.xlu0 %819
        %822 = vset.pattern.permute.xlu0 81
        %823 = vperm.xlu0 %822, %v184
        %v824 = vpop.permute.xlu0 %823
        %826 = vset.pattern.permute.xlu0 81
        %827 = vperm.xlu0 %826, %v185
        %v828 = vpop.permute.xlu0 %827
        %830 = vset.pattern.permute.xlu0 81
        %831 = vperm.xlu0 %830, %v186
        %v832 = vpop.permute.xlu0 %831
        %v834 = vmul.f32 %v810, %v820
        %v835 = vmul.f32 %v811, %v820
        %v836 = vmul.f32 %v812, %v824
        %v837 = vmul.f32 %v813, %v824
        %v838 = vmul.f32 %v814, %v828
        %v839 = vmul.f32 %v815, %v828
        %v840 = vmul.f32 %v816, %v832
        %v841 = vmul.f32 %v817, %v832
        %842 = vset.pattern.permute.xlu0 82
        %843 = vperm.xlu0 %842, %v183
        %v844 = vpop.permute.xlu0 %843
        %846 = vset.pattern.permute.xlu0 82
        %847 = vperm.xlu0 %846, %v184
        %v848 = vpop.permute.xlu0 %847
        %850 = vset.pattern.permute.xlu0 82
        %851 = vperm.xlu0 %850, %v185
        %v852 = vpop.permute.xlu0 %851
        %854 = vset.pattern.permute.xlu0 82
        %855 = vperm.xlu0 %854, %v186
        %v856 = vpop.permute.xlu0 %855
        %v858 = vadd.f32 %v834, %v844
        %v859 = vadd.f32 %v835, %v844
        %v860 = vadd.f32 %v836, %v848
        %v861 = vadd.f32 %v837, %v848
        %v862 = vadd.f32 %v838, %v852
        %v863 = vadd.f32 %v839, %v852
        %v864 = vadd.f32 %v840, %v856
        %v865 = vadd.f32 %v841, %v856
        %v866 = vmax.f32 %v858, 0.0
        %v867 = vmax.f32 %v859, 0.0
        %v868 = vmax.f32 %v860, 0.0
        %v869 = vmax.f32 %v861, 0.0
        %v870 = vmax.f32 %v862, 0.0
        %v871 = vmax.f32 %v863, 0.0
        %v872 = vmax.f32 %v864, 0.0
        %v873 = vmax.f32 %v865, 0.0
        %874 = vset.pattern.permute.xlu0 83
        %875 = vperm.xlu0 %874, %v183
        %v876 = vpop.permute.xlu0 %875
        %878 = vset.pattern.permute.xlu0 83
        %879 = vperm.xlu0 %878, %v184
        %v880 = vpop.permute.xlu0 %879
        %882 = vset.pattern.permute.xlu0 83
        %883 = vperm.xlu0 %882, %v185
        %v884 = vpop.permute.xlu0 %883
        %886 = vset.pattern.permute.xlu0 83
        %887 = vperm.xlu0 %886, %v186
        %v888 = vpop.permute.xlu0 %887
        %890 = vrot.lane.b32.xlu0 %v183, 112
        %v891 = vpop.permute.xlu0 %890
        %892 = vrot.lane.b32.xlu0 %v184, 112
        %v893 = vpop.permute.xlu0 %892
        %894 = vrot.lane.b32.xlu0 %v185, 112
        %v895 = vpop.permute.xlu0 %894
        %896 = vrot.lane.b32.xlu0 %v186, 112
        %v897 = vpop.permute.xlu0 %896
        %vm898 = vcmask 261120
        %v899 = vsel %vm898, %v891, 0
        %v901 = vsel %vm898, %v893, 0
        %v903 = vsel %vm898, %v895, 0
        %v905 = vsel %vm898, %v897, 0
        %907 = vmatpush.msra.mxu0 0.0
        %908 = vmatpush.msra.mxu0 0.0
        %909 = vmatpush.msra.mxu0 0.0
        %910 = vmatpush.msra.mxu0 0.0
        %911 = vmatpush.msra.mxu0 0.0
        %912 = vmatpush.msra.mxu0 0.0
        %913 = vmatpush.msra.mxu0 0.0
        %914 = vmatpush.msra.mxu0 0.0
        %915 = vmatpush.msra.mxu0 0.0
        %916 = vmatpush.msra.mxu0 0.0
        %917 = vmatpush.msra.mxu0 0.0
        %918 = vmatpush.msra.mxu0 0.0
        %v919 = vand.u32 %v872, 4294901760
        %920 = vmatpush.msra.mxu0 %v919
        %v921 = vand.u32 %v870, 4294901760
        %922 = vmatpush.msra.mxu0 %v921
        %v923 = vand.u32 %v868, 4294901760
        %924 = vmatpush.msra.mxu0 %v923
        %v925 = vand.u32 %v866, 4294901760
        %926 = vmatpush.msra.mxu0 %v925
        %v927 = vand.u32 %v899, 4294901760
        %v928 = vsub.f32 %v899, %v927
        %v929 = vand.u32 %v928, 4294901760
        %v930 = vsub.f32 %v928, %v929
        %v931 = vand.u32 %v930, 4294901760
        %932 = vmatmul.f32.gmra.mxu0 %v931
        %v933 = vpop.f32.mrf.mxu0
        %v934 = vadd.f32 %v876, %v933
        %v935 = vand.u32 %v901, 4294901760
        %v936 = vsub.f32 %v901, %v935
        %v937 = vand.u32 %v936, 4294901760
        %v938 = vsub.f32 %v936, %v937
        %v939 = vand.u32 %v938, 4294901760
        %940 = vmatmul.f32.gmra.mxu0 %v939
        %v941 = vpop.f32.mrf.mxu0
        %v942 = vadd.f32 %v880, %v941
        %v943 = vand.u32 %v903, 4294901760
        %v944 = vsub.f32 %v903, %v943
        %v945 = vand.u32 %v944, 4294901760
        %v946 = vsub.f32 %v944, %v945
        %v947 = vand.u32 %v946, 4294901760
        %948 = vmatmul.f32.gmra.mxu0 %v947
        %v949 = vpop.f32.mrf.mxu0
        %v950 = vadd.f32 %v884, %v949
        %v951 = vand.u32 %v905, 4294901760
        %v952 = vsub.f32 %v905, %v951
        %v953 = vand.u32 %v952, 4294901760
        %v954 = vsub.f32 %v952, %v953
        %v955 = vand.u32 %v954, 4294901760
        %956 = vmatmul.f32.gmra.mxu0 %v955
        %v957 = vpop.f32.mrf.mxu0
        %v958 = vadd.f32 %v888, %v957
        %959 = vdwg.mxu0
        %960 = vmatpush.msra.mxu0 0.0
        %961 = vmatpush.msra.mxu0 0.0
        %962 = vmatpush.msra.mxu0 0.0
        %963 = vmatpush.msra.mxu0 0.0
        %964 = vmatpush.msra.mxu0 0.0
        %965 = vmatpush.msra.mxu0 0.0
        %966 = vmatpush.msra.mxu0 0.0
        %967 = vmatpush.msra.mxu0 0.0
        %968 = vmatpush.msra.mxu0 0.0
        %969 = vmatpush.msra.mxu0 0.0
        %970 = vmatpush.msra.mxu0 0.0
        %971 = vmatpush.msra.mxu0 0.0
        %v972 = vand.u32 %v872, 4294901760
        %v973 = vsub.f32 %v872, %v972
        %v974 = vand.u32 %v973, 4294901760
        %v975 = vsub.f32 %v973, %v974
        %v976 = vand.u32 %v975, 4294901760
        %977 = vmatpush.msra.mxu0 %v976
        %v978 = vand.u32 %v870, 4294901760
        %v979 = vsub.f32 %v870, %v978
        %v980 = vand.u32 %v979, 4294901760
        %v981 = vsub.f32 %v979, %v980
        %v982 = vand.u32 %v981, 4294901760
        %983 = vmatpush.msra.mxu0 %v982
        %v984 = vand.u32 %v868, 4294901760
        %v985 = vsub.f32 %v868, %v984
        %v986 = vand.u32 %v985, 4294901760
        %v987 = vsub.f32 %v985, %v986
        %v988 = vand.u32 %v987, 4294901760
        %989 = vmatpush.msra.mxu0 %v988
        %v990 = vand.u32 %v866, 4294901760
        %v991 = vsub.f32 %v866, %v990
        %v992 = vand.u32 %v991, 4294901760
        %v993 = vsub.f32 %v991, %v992
        %v994 = vand.u32 %v993, 4294901760
        %995 = vmatpush.msra.mxu0 %v994
        %v996 = vand.u32 %v899, 4294901760
        %997 = vmatmul.f32.gmra.mxu0 %v996
        %v998 = vpop.f32.mrf.mxu0
        %v999 = vadd.f32 %v934, %v998
        %v1000 = vand.u32 %v901, 4294901760
        %1001 = vmatmul.f32.gmra.mxu0 %v1000
        %v1002 = vpop.f32.mrf.mxu0
        %v1003 = vadd.f32 %v942, %v1002
        %v1004 = vand.u32 %v903, 4294901760
        %1005 = vmatmul.f32.gmra.mxu0 %v1004
        %v1006 = vpop.f32.mrf.mxu0
        %v1007 = vadd.f32 %v950, %v1006
        %v1008 = vand.u32 %v905, 4294901760
        %1009 = vmatmul.f32.gmra.mxu0 %v1008
        %v1010 = vpop.f32.mrf.mxu0
        %v1011 = vadd.f32 %v958, %v1010
        %1012 = vdwg.mxu0
        %1013 = vmatpush.msra.mxu0 0.0
        %1014 = vmatpush.msra.mxu0 0.0
        %1015 = vmatpush.msra.mxu0 0.0
        %1016 = vmatpush.msra.mxu0 0.0
        %1017 = vmatpush.msra.mxu0 0.0
        %1018 = vmatpush.msra.mxu0 0.0
        %1019 = vmatpush.msra.mxu0 0.0
        %1020 = vmatpush.msra.mxu0 0.0
        %1021 = vmatpush.msra.mxu0 0.0
        %1022 = vmatpush.msra.mxu0 0.0
        %1023 = vmatpush.msra.mxu0 0.0
        %1024 = vmatpush.msra.mxu0 0.0
        %v1025 = vand.u32 %v872, 4294901760
        %v1026 = vsub.f32 %v872, %v1025
        %1027 = vmatpush.msra.mxu0 %v1026
        %v1028 = vand.u32 %v870, 4294901760
        %v1029 = vsub.f32 %v870, %v1028
        %1030 = vmatpush.msra.mxu0 %v1029
        %v1031 = vand.u32 %v868, 4294901760
        %v1032 = vsub.f32 %v868, %v1031
        %1033 = vmatpush.msra.mxu0 %v1032
        %v1034 = vand.u32 %v866, 4294901760
        %v1035 = vsub.f32 %v866, %v1034
        %1036 = vmatpush.msra.mxu0 %v1035
        %v1037 = vand.u32 %v899, 4294901760
        %v1038 = vsub.f32 %v899, %v1037
        %1039 = vmatmul.f32.gmra.mxu0 %v1038
        %v1040 = vpop.f32.mrf.mxu0
        %v1041 = vadd.f32 %v999, %v1040
        %v1042 = vand.u32 %v901, 4294901760
        %v1043 = vsub.f32 %v901, %v1042
        %1044 = vmatmul.f32.gmra.mxu0 %v1043
        %v1045 = vpop.f32.mrf.mxu0
        %v1046 = vadd.f32 %v1003, %v1045
        %v1047 = vand.u32 %v903, 4294901760
        %v1048 = vsub.f32 %v903, %v1047
        %1049 = vmatmul.f32.gmra.mxu0 %v1048
        %v1050 = vpop.f32.mrf.mxu0
        %v1051 = vadd.f32 %v1007, %v1050
        %v1052 = vand.u32 %v905, 4294901760
        %v1053 = vsub.f32 %v905, %v1052
        %1054 = vmatmul.f32.gmra.mxu0 %v1053
        %v1055 = vpop.f32.mrf.mxu0
        %v1056 = vadd.f32 %v1011, %v1055
        %1057 = vdwg.mxu0
        %1058 = vmatpush.msra.mxu0 0.0
        %1059 = vmatpush.msra.mxu0 0.0
        %1060 = vmatpush.msra.mxu0 0.0
        %1061 = vmatpush.msra.mxu0 0.0
        %1062 = vmatpush.msra.mxu0 0.0
        %1063 = vmatpush.msra.mxu0 0.0
        %1064 = vmatpush.msra.mxu0 0.0
        %1065 = vmatpush.msra.mxu0 0.0
        %1066 = vmatpush.msra.mxu0 0.0
        %1067 = vmatpush.msra.mxu0 0.0
        %1068 = vmatpush.msra.mxu0 0.0
        %1069 = vmatpush.msra.mxu0 0.0
        %v1070 = vand.u32 %v872, 4294901760
        %1071 = vmatpush.msra.mxu0 %v1070
        %v1072 = vand.u32 %v870, 4294901760
        %1073 = vmatpush.msra.mxu0 %v1072
        %v1074 = vand.u32 %v868, 4294901760
        %1075 = vmatpush.msra.mxu0 %v1074
        %v1076 = vand.u32 %v866, 4294901760
        %1077 = vmatpush.msra.mxu0 %v1076
        %v1078 = vand.u32 %v899, 4294901760
        %v1079 = vsub.f32 %v899, %v1078
        %v1080 = vand.u32 %v1079, 4294901760
        %1081 = vmatmul.f32.gmra.mxu0 %v1080
        %v1082 = vpop.f32.mrf.mxu0
        %v1083 = vadd.f32 %v1041, %v1082
        %v1084 = vand.u32 %v901, 4294901760
        %v1085 = vsub.f32 %v901, %v1084
        %v1086 = vand.u32 %v1085, 4294901760
        %1087 = vmatmul.f32.gmra.mxu0 %v1086
        %v1088 = vpop.f32.mrf.mxu0
        %v1089 = vadd.f32 %v1046, %v1088
        %v1090 = vand.u32 %v903, 4294901760
        %v1091 = vsub.f32 %v903, %v1090
        %v1092 = vand.u32 %v1091, 4294901760
        %1093 = vmatmul.f32.gmra.mxu0 %v1092
        %v1094 = vpop.f32.mrf.mxu0
        %v1095 = vadd.f32 %v1051, %v1094
        %v1096 = vand.u32 %v905, 4294901760
        %v1097 = vsub.f32 %v905, %v1096
        %v1098 = vand.u32 %v1097, 4294901760
        %1099 = vmatmul.f32.gmra.mxu0 %v1098
        %v1100 = vpop.f32.mrf.mxu0
        %v1101 = vadd.f32 %v1056, %v1100
        %1102 = vdwg.mxu0
        %1103 = vmatpush.msra.mxu0 0.0
        %1104 = vmatpush.msra.mxu0 0.0
        %1105 = vmatpush.msra.mxu0 0.0
        %1106 = vmatpush.msra.mxu0 0.0
        %1107 = vmatpush.msra.mxu0 0.0
        %1108 = vmatpush.msra.mxu0 0.0
        %1109 = vmatpush.msra.mxu0 0.0
        %1110 = vmatpush.msra.mxu0 0.0
        %1111 = vmatpush.msra.mxu0 0.0
        %1112 = vmatpush.msra.mxu0 0.0
        %1113 = vmatpush.msra.mxu0 0.0
        %1114 = vmatpush.msra.mxu0 0.0
        %v1115 = vand.u32 %v872, 4294901760
        %v1116 = vsub.f32 %v872, %v1115
        %v1117 = vand.u32 %v1116, 4294901760
        %1118 = vmatpush.msra.mxu0 %v1117
        %v1119 = vand.u32 %v870, 4294901760
        %v1120 = vsub.f32 %v870, %v1119
        %v1121 = vand.u32 %v1120, 4294901760
        %1122 = vmatpush.msra.mxu0 %v1121
        %v1123 = vand.u32 %v868, 4294901760
        %v1124 = vsub.f32 %v868, %v1123
        %v1125 = vand.u32 %v1124, 4294901760
        %1126 = vmatpush.msra.mxu0 %v1125
        %v1127 = vand.u32 %v866, 4294901760
        %v1128 = vsub.f32 %v866, %v1127
        %v1129 = vand.u32 %v1128, 4294901760
        %1130 = vmatpush.msra.mxu0 %v1129
        %v1131 = vand.u32 %v899, 4294901760
        %1132 = vmatmul.f32.gmra.mxu0 %v1131
        %v1133 = vpop.f32.mrf.mxu0
        %v1134 = vadd.f32 %v1083, %v1133
        %v1135 = vand.u32 %v901, 4294901760
        %1136 = vmatmul.f32.gmra.mxu0 %v1135
        %v1137 = vpop.f32.mrf.mxu0
        %v1138 = vadd.f32 %v1089, %v1137
        %v1139 = vand.u32 %v903, 4294901760
        %1140 = vmatmul.f32.gmra.mxu0 %v1139
        %v1141 = vpop.f32.mrf.mxu0
        %v1142 = vadd.f32 %v1095, %v1141
        %v1143 = vand.u32 %v905, 4294901760
        %1144 = vmatmul.f32.gmra.mxu0 %v1143
        %v1145 = vpop.f32.mrf.mxu0
        %v1146 = vadd.f32 %v1101, %v1145
        %1147 = vdwg.mxu0
        %1148 = vmatpush.msra.mxu0 0.0
        %1149 = vmatpush.msra.mxu0 0.0
        %1150 = vmatpush.msra.mxu0 0.0
        %1151 = vmatpush.msra.mxu0 0.0
        %1152 = vmatpush.msra.mxu0 0.0
        %1153 = vmatpush.msra.mxu0 0.0
        %1154 = vmatpush.msra.mxu0 0.0
        %1155 = vmatpush.msra.mxu0 0.0
        %1156 = vmatpush.msra.mxu0 0.0
        %1157 = vmatpush.msra.mxu0 0.0
        %1158 = vmatpush.msra.mxu0 0.0
        %1159 = vmatpush.msra.mxu0 0.0
        %v1160 = vand.u32 %v872, 4294901760
        %1161 = vmatpush.msra.mxu0 %v1160
        %v1162 = vand.u32 %v870, 4294901760
        %1163 = vmatpush.msra.mxu0 %v1162
        %v1164 = vand.u32 %v868, 4294901760
        %1165 = vmatpush.msra.mxu0 %v1164
        %v1166 = vand.u32 %v866, 4294901760
        %1167 = vmatpush.msra.mxu0 %v1166
        %v1168 = vand.u32 %v899, 4294901760
        %1169 = vmatmul.f32.gmra.mxu0 %v1168
        %v1170 = vpop.f32.mrf.mxu0
        %v1171 = vadd.f32 %v1134, %v1170
        %v1172 = vand.u32 %v901, 4294901760
        %1173 = vmatmul.f32.gmra.mxu0 %v1172
        %v1174 = vpop.f32.mrf.mxu0
        %v1175 = vadd.f32 %v1138, %v1174
        %v1176 = vand.u32 %v903, 4294901760
        %1177 = vmatmul.f32.gmra.mxu0 %v1176
        %v1178 = vpop.f32.mrf.mxu0
        %v1179 = vadd.f32 %v1142, %v1178
        %v1180 = vand.u32 %v905, 4294901760
        %1181 = vmatmul.f32.gmra.mxu0 %v1180
        %v1182 = vpop.f32.mrf.mxu0
        %v1183 = vadd.f32 %v1146, %v1182
        %1184 = vdwg.mxu0
        %1185 = vmatpush.msra.mxu0 0.0
        %1186 = vmatpush.msra.mxu0 0.0
        %1187 = vmatpush.msra.mxu0 0.0
        %1188 = vmatpush.msra.mxu0 0.0
        %1189 = vmatpush.msra.mxu0 0.0
        %1190 = vmatpush.msra.mxu0 0.0
        %1191 = vmatpush.msra.mxu0 0.0
        %1192 = vmatpush.msra.mxu0 0.0
        %1193 = vmatpush.msra.mxu0 0.0
        %1194 = vmatpush.msra.mxu0 0.0
        %1195 = vmatpush.msra.mxu0 0.0
        %1196 = vmatpush.msra.mxu0 0.0
        %v1197 = vand.u32 %v873, 4294901760
        %1198 = vmatpush.msra.mxu0 %v1197
        %v1199 = vand.u32 %v871, 4294901760
        %1200 = vmatpush.msra.mxu0 %v1199
        %v1201 = vand.u32 %v869, 4294901760
        %1202 = vmatpush.msra.mxu0 %v1201
        %v1203 = vand.u32 %v867, 4294901760
        %1204 = vmatpush.msra.mxu0 %v1203
        %v1205 = vand.u32 %v899, 4294901760
        %v1206 = vsub.f32 %v899, %v1205
        %v1207 = vand.u32 %v1206, 4294901760
        %v1208 = vsub.f32 %v1206, %v1207
        %v1209 = vand.u32 %v1208, 4294901760
        %1210 = vmatmul.f32.gmra.mxu0 %v1209
        %v1211 = vpop.f32.mrf.mxu0
        %v1212 = vadd.f32 %v876, %v1211
        %v1213 = vand.u32 %v901, 4294901760
        %v1214 = vsub.f32 %v901, %v1213
        %v1215 = vand.u32 %v1214, 4294901760
        %v1216 = vsub.f32 %v1214, %v1215
        %v1217 = vand.u32 %v1216, 4294901760
        %1218 = vmatmul.f32.gmra.mxu0 %v1217
        %v1219 = vpop.f32.mrf.mxu0
        %v1220 = vadd.f32 %v880, %v1219
        %v1221 = vand.u32 %v903, 4294901760
        %v1222 = vsub.f32 %v903, %v1221
        %v1223 = vand.u32 %v1222, 4294901760
        %v1224 = vsub.f32 %v1222, %v1223
        %v1225 = vand.u32 %v1224, 4294901760
        %1226 = vmatmul.f32.gmra.mxu0 %v1225
        %v1227 = vpop.f32.mrf.mxu0
        %v1228 = vadd.f32 %v884, %v1227
        %v1229 = vand.u32 %v905, 4294901760
        %v1230 = vsub.f32 %v905, %v1229
        %v1231 = vand.u32 %v1230, 4294901760
        %v1232 = vsub.f32 %v1230, %v1231
        %v1233 = vand.u32 %v1232, 4294901760
        %1234 = vmatmul.f32.gmra.mxu0 %v1233
        %v1235 = vpop.f32.mrf.mxu0
        %v1236 = vadd.f32 %v888, %v1235
        %1237 = vdwg.mxu0
        %1238 = vmatpush.msra.mxu0 0.0
        %1239 = vmatpush.msra.mxu0 0.0
        %1240 = vmatpush.msra.mxu0 0.0
        %1241 = vmatpush.msra.mxu0 0.0
        %1242 = vmatpush.msra.mxu0 0.0
        %1243 = vmatpush.msra.mxu0 0.0
        %1244 = vmatpush.msra.mxu0 0.0
        %1245 = vmatpush.msra.mxu0 0.0
        %1246 = vmatpush.msra.mxu0 0.0
        %1247 = vmatpush.msra.mxu0 0.0
        %1248 = vmatpush.msra.mxu0 0.0
        %1249 = vmatpush.msra.mxu0 0.0
        %v1250 = vand.u32 %v873, 4294901760
        %v1251 = vsub.f32 %v873, %v1250
        %v1252 = vand.u32 %v1251, 4294901760
        %v1253 = vsub.f32 %v1251, %v1252
        %v1254 = vand.u32 %v1253, 4294901760
        %1255 = vmatpush.msra.mxu0 %v1254
        %v1256 = vand.u32 %v871, 4294901760
        %v1257 = vsub.f32 %v871, %v1256
        %v1258 = vand.u32 %v1257, 4294901760
        %v1259 = vsub.f32 %v1257, %v1258
        %v1260 = vand.u32 %v1259, 4294901760
        %1261 = vmatpush.msra.mxu0 %v1260
        %v1262 = vand.u32 %v869, 4294901760
        %v1263 = vsub.f32 %v869, %v1262
        %v1264 = vand.u32 %v1263, 4294901760
        %v1265 = vsub.f32 %v1263, %v1264
        %v1266 = vand.u32 %v1265, 4294901760
        %1267 = vmatpush.msra.mxu0 %v1266
        %v1268 = vand.u32 %v867, 4294901760
        %v1269 = vsub.f32 %v867, %v1268
        %v1270 = vand.u32 %v1269, 4294901760
        %v1271 = vsub.f32 %v1269, %v1270
        %v1272 = vand.u32 %v1271, 4294901760
        %1273 = vmatpush.msra.mxu0 %v1272
        %v1274 = vand.u32 %v899, 4294901760
        %1275 = vmatmul.f32.gmra.mxu0 %v1274
        %v1276 = vpop.f32.mrf.mxu0
        %v1277 = vadd.f32 %v1212, %v1276
        %v1278 = vand.u32 %v901, 4294901760
        %1279 = vmatmul.f32.gmra.mxu0 %v1278
        %v1280 = vpop.f32.mrf.mxu0
        %v1281 = vadd.f32 %v1220, %v1280
        %v1282 = vand.u32 %v903, 4294901760
        %1283 = vmatmul.f32.gmra.mxu0 %v1282
        %v1284 = vpop.f32.mrf.mxu0
        %v1285 = vadd.f32 %v1228, %v1284
        %v1286 = vand.u32 %v905, 4294901760
        %1287 = vmatmul.f32.gmra.mxu0 %v1286
        %v1288 = vpop.f32.mrf.mxu0
        %v1289 = vadd.f32 %v1236, %v1288
        %1290 = vdwg.mxu0
        %1291 = vmatpush.msra.mxu0 0.0
        %1292 = vmatpush.msra.mxu0 0.0
        %1293 = vmatpush.msra.mxu0 0.0
        %1294 = vmatpush.msra.mxu0 0.0
        %1295 = vmatpush.msra.mxu0 0.0
        %1296 = vmatpush.msra.mxu0 0.0
        %1297 = vmatpush.msra.mxu0 0.0
        %1298 = vmatpush.msra.mxu0 0.0
        %1299 = vmatpush.msra.mxu0 0.0
        %1300 = vmatpush.msra.mxu0 0.0
        %1301 = vmatpush.msra.mxu0 0.0
        %1302 = vmatpush.msra.mxu0 0.0
        %v1303 = vand.u32 %v873, 4294901760
        %v1304 = vsub.f32 %v873, %v1303
        %1305 = vmatpush.msra.mxu0 %v1304
        %v1306 = vand.u32 %v871, 4294901760
        %v1307 = vsub.f32 %v871, %v1306
        %1308 = vmatpush.msra.mxu0 %v1307
        %v1309 = vand.u32 %v869, 4294901760
        %v1310 = vsub.f32 %v869, %v1309
        %1311 = vmatpush.msra.mxu0 %v1310
        %v1312 = vand.u32 %v867, 4294901760
        %v1313 = vsub.f32 %v867, %v1312
        %1314 = vmatpush.msra.mxu0 %v1313
        %v1315 = vand.u32 %v899, 4294901760
        %v1316 = vsub.f32 %v899, %v1315
        %1317 = vmatmul.f32.gmra.mxu0 %v1316
        %v1318 = vpop.f32.mrf.mxu0
        %v1319 = vadd.f32 %v1277, %v1318
        %v1320 = vand.u32 %v901, 4294901760
        %v1321 = vsub.f32 %v901, %v1320
        %1322 = vmatmul.f32.gmra.mxu0 %v1321
        %v1323 = vpop.f32.mrf.mxu0
        %v1324 = vadd.f32 %v1281, %v1323
        %v1325 = vand.u32 %v903, 4294901760
        %v1326 = vsub.f32 %v903, %v1325
        %1327 = vmatmul.f32.gmra.mxu0 %v1326
        %v1328 = vpop.f32.mrf.mxu0
        %v1329 = vadd.f32 %v1285, %v1328
        %v1330 = vand.u32 %v905, 4294901760
        %v1331 = vsub.f32 %v905, %v1330
        %1332 = vmatmul.f32.gmra.mxu0 %v1331
        %v1333 = vpop.f32.mrf.mxu0
        %v1334 = vadd.f32 %v1289, %v1333
        %1335 = vdwg.mxu0
        %1336 = vmatpush.msra.mxu0 0.0
        %1337 = vmatpush.msra.mxu0 0.0
        %1338 = vmatpush.msra.mxu0 0.0
        %1339 = vmatpush.msra.mxu0 0.0
        %1340 = vmatpush.msra.mxu0 0.0
        %1341 = vmatpush.msra.mxu0 0.0
        %1342 = vmatpush.msra.mxu0 0.0
        %1343 = vmatpush.msra.mxu0 0.0
        %1344 = vmatpush.msra.mxu0 0.0
        %1345 = vmatpush.msra.mxu0 0.0
        %1346 = vmatpush.msra.mxu0 0.0
        %1347 = vmatpush.msra.mxu0 0.0
        %v1348 = vand.u32 %v873, 4294901760
        %1349 = vmatpush.msra.mxu0 %v1348
        %v1350 = vand.u32 %v871, 4294901760
        %1351 = vmatpush.msra.mxu0 %v1350
        %v1352 = vand.u32 %v869, 4294901760
        %1353 = vmatpush.msra.mxu0 %v1352
        %v1354 = vand.u32 %v867, 4294901760
        %1355 = vmatpush.msra.mxu0 %v1354
        %v1356 = vand.u32 %v899, 4294901760
        %v1357 = vsub.f32 %v899, %v1356
        %v1358 = vand.u32 %v1357, 4294901760
        %1359 = vmatmul.f32.gmra.mxu0 %v1358
        %v1360 = vpop.f32.mrf.mxu0
        %v1361 = vadd.f32 %v1319, %v1360
        %v1362 = vand.u32 %v901, 4294901760
        %v1363 = vsub.f32 %v901, %v1362
        %v1364 = vand.u32 %v1363, 4294901760
        %1365 = vmatmul.f32.gmra.mxu0 %v1364
        %v1366 = vpop.f32.mrf.mxu0
        %v1367 = vadd.f32 %v1324, %v1366
        %v1368 = vand.u32 %v903, 4294901760
        %v1369 = vsub.f32 %v903, %v1368
        %v1370 = vand.u32 %v1369, 4294901760
        %1371 = vmatmul.f32.gmra.mxu0 %v1370
        %v1372 = vpop.f32.mrf.mxu0
        %v1373 = vadd.f32 %v1329, %v1372
        %v1374 = vand.u32 %v905, 4294901760
        %v1375 = vsub.f32 %v905, %v1374
        %v1376 = vand.u32 %v1375, 4294901760
        %1377 = vmatmul.f32.gmra.mxu0 %v1376
        %v1378 = vpop.f32.mrf.mxu0
        %v1379 = vadd.f32 %v1334, %v1378
        %1380 = vdwg.mxu0
        %1381 = vmatpush.msra.mxu0 0.0
        %1382 = vmatpush.msra.mxu0 0.0
        %1383 = vmatpush.msra.mxu0 0.0
        %1384 = vmatpush.msra.mxu0 0.0
        %1385 = vmatpush.msra.mxu0 0.0
        %1386 = vmatpush.msra.mxu0 0.0
        %1387 = vmatpush.msra.mxu0 0.0
        %1388 = vmatpush.msra.mxu0 0.0
        %1389 = vmatpush.msra.mxu0 0.0
        %1390 = vmatpush.msra.mxu0 0.0
        %1391 = vmatpush.msra.mxu0 0.0
        %1392 = vmatpush.msra.mxu0 0.0
        %v1393 = vand.u32 %v873, 4294901760
        %v1394 = vsub.f32 %v873, %v1393
        %v1395 = vand.u32 %v1394, 4294901760
        %1396 = vmatpush.msra.mxu0 %v1395
        %v1397 = vand.u32 %v871, 4294901760
        %v1398 = vsub.f32 %v871, %v1397
        %v1399 = vand.u32 %v1398, 4294901760
        %1400 = vmatpush.msra.mxu0 %v1399
        %v1401 = vand.u32 %v869, 4294901760
        %v1402 = vsub.f32 %v869, %v1401
        %v1403 = vand.u32 %v1402, 4294901760
        %1404 = vmatpush.msra.mxu0 %v1403
        %v1405 = vand.u32 %v867, 4294901760
        %v1406 = vsub.f32 %v867, %v1405
        %v1407 = vand.u32 %v1406, 4294901760
        %1408 = vmatpush.msra.mxu0 %v1407
        %v1409 = vand.u32 %v899, 4294901760
        %1410 = vmatmul.f32.gmra.mxu0 %v1409
        %v1411 = vpop.f32.mrf.mxu0
        %v1412 = vadd.f32 %v1361, %v1411
        %v1413 = vand.u32 %v901, 4294901760
        %1414 = vmatmul.f32.gmra.mxu0 %v1413
        %v1415 = vpop.f32.mrf.mxu0
        %v1416 = vadd.f32 %v1367, %v1415
        %v1417 = vand.u32 %v903, 4294901760
        %1418 = vmatmul.f32.gmra.mxu0 %v1417
        %v1419 = vpop.f32.mrf.mxu0
        %v1420 = vadd.f32 %v1373, %v1419
        %v1421 = vand.u32 %v905, 4294901760
        %1422 = vmatmul.f32.gmra.mxu0 %v1421
        %v1423 = vpop.f32.mrf.mxu0
        %v1424 = vadd.f32 %v1379, %v1423
        %1425 = vdwg.mxu0
        %1426 = vmatpush.msra.mxu0 0.0
        %1427 = vmatpush.msra.mxu0 0.0
        %1428 = vmatpush.msra.mxu0 0.0
        %1429 = vmatpush.msra.mxu0 0.0
        %1430 = vmatpush.msra.mxu0 0.0
        %1431 = vmatpush.msra.mxu0 0.0
        %1432 = vmatpush.msra.mxu0 0.0
        %1433 = vmatpush.msra.mxu0 0.0
        %1434 = vmatpush.msra.mxu0 0.0
        %1435 = vmatpush.msra.mxu0 0.0
        %1436 = vmatpush.msra.mxu0 0.0
        %1437 = vmatpush.msra.mxu0 0.0
        %v1438 = vand.u32 %v873, 4294901760
        %1439 = vmatpush.msra.mxu0 %v1438
        %v1440 = vand.u32 %v871, 4294901760
        %1441 = vmatpush.msra.mxu0 %v1440
        %v1442 = vand.u32 %v869, 4294901760
        %1443 = vmatpush.msra.mxu0 %v1442
        %v1444 = vand.u32 %v867, 4294901760
        %1445 = vmatpush.msra.mxu0 %v1444
        %v1446 = vand.u32 %v899, 4294901760
        %1447 = vmatmul.f32.gmra.mxu0 %v1446
        %v1448 = vpop.f32.mrf.mxu0
        %v1449 = vadd.f32 %v1412, %v1448
        %v1450 = vand.u32 %v901, 4294901760
        %1451 = vmatmul.f32.gmra.mxu0 %v1450
        %v1452 = vpop.f32.mrf.mxu0
        %v1453 = vadd.f32 %v1416, %v1452
        %v1454 = vand.u32 %v903, 4294901760
        %1455 = vmatmul.f32.gmra.mxu0 %v1454
        %v1456 = vpop.f32.mrf.mxu0
        %v1457 = vadd.f32 %v1420, %v1456
        %v1458 = vand.u32 %v905, 4294901760
        %1459 = vmatmul.f32.gmra.mxu0 %v1458
        %v1460 = vpop.f32.mrf.mxu0
        %v1461 = vadd.f32 %v1424, %v1460
        %1462 = vdwg.mxu0
        %v1463 = vadd.f32 %v1171, %v1175
        %v1464 = vadd.f32 %v1463, %v1179
        %v1465 = vadd.f32 %v1464, %v1183
        %v1466 = vrot.slane %v1465, 4
        %v1467 = vadd.f32 %v1465, %v1466
        %v1468 = vrot.slane %v1467, 2
        %v1469 = vadd.f32 %v1467, %v1468
        %v1470 = vrot.slane %v1469, 1
        %v1471 = vadd.f32 %v1469, %v1470
        %v1472 = vadd.f32 %v1449, %v1453
        %v1473 = vadd.f32 %v1472, %v1457
        %v1474 = vadd.f32 %v1473, %v1461
        %v1475 = vrot.slane %v1474, 4
        %v1476 = vadd.f32 %v1474, %v1475
        %v1477 = vrot.slane %v1476, 2
        %v1478 = vadd.f32 %v1476, %v1477
        %v1479 = vrot.slane %v1478, 1
        %v1480 = vadd.f32 %v1478, %v1479
        %v1481 = vmul.f32 %v1471, %v749
        %v1482 = vmul.f32 %v1480, %v749
        %v1483 = vsub.f32 %v1171, %v1481
        %v1484 = vsub.f32 %v1449, %v1482
        %v1485 = vsub.f32 %v1175, %v1481
        %v1486 = vsub.f32 %v1453, %v1482
        %v1487 = vsub.f32 %v1179, %v1481
        %v1488 = vsub.f32 %v1457, %v1482
        %v1489 = vsub.f32 %v1183, %v1481
        %v1490 = vsub.f32 %v1461, %v1482
        %v1491 = vmul.f32 %v1483, %v1483
        %v1492 = vmul.f32 %v1484, %v1484
        %v1493 = vmul.f32 %v1485, %v1485
        %v1494 = vmul.f32 %v1486, %v1486
        %v1495 = vmul.f32 %v1487, %v1487
        %v1496 = vmul.f32 %v1488, %v1488
        %v1497 = vmul.f32 %v1489, %v1489
        %v1498 = vmul.f32 %v1490, %v1490
        %v1499 = vadd.f32 %v1491, %v1493
        %v1500 = vadd.f32 %v1499, %v1495
        %v1501 = vadd.f32 %v1500, %v1497
        %v1502 = vrot.slane %v1501, 4
        %v1503 = vadd.f32 %v1501, %v1502
        %v1504 = vrot.slane %v1503, 2
        %v1505 = vadd.f32 %v1503, %v1504
        %v1506 = vrot.slane %v1505, 1
        %v1507 = vadd.f32 %v1505, %v1506
        %v1508 = vadd.f32 %v1492, %v1494
        %v1509 = vadd.f32 %v1508, %v1496
        %v1510 = vadd.f32 %v1509, %v1498
        %v1511 = vrot.slane %v1510, 4
        %v1512 = vadd.f32 %v1510, %v1511
        %v1513 = vrot.slane %v1512, 2
        %v1514 = vadd.f32 %v1512, %v1513
        %v1515 = vrot.slane %v1514, 1
        %v1516 = vadd.f32 %v1514, %v1515
        %v1517 = vmul.f32 %v1507, %v749
        %v1518 = vmul.f32 %v1516, %v749
        %v1519 = vadd.f32 %v1517, 1e-05
        %v1520 = vadd.f32 %v1518, 1e-05
        %v1521 = vrsqrt.pop %v1519
        %v1522 = vmul.f32 %v1521, %v1519
        %v1523 = vmul.f32 %v1522, %v1521
        %v1524 = vmul.f32 0.5, %v1523
        %v1525 = vsub.f32 1.5, %v1524
        %v1526 = vmul.f32 %v1521, %v1525
        %vm1527 = vweird.f32 %v1519
        %vm1528 = vweird.f32 %v1521
        %vm1529 = vmor %vm1527, %vm1528
        %v1530 = vsel %vm1529, %v1521, %v1526
        %v1531 = vrsqrt.pop %v1520
        %v1532 = vmul.f32 %v1531, %v1520
        %v1533 = vmul.f32 %v1532, %v1531
        %v1534 = vmul.f32 0.5, %v1533
        %v1535 = vsub.f32 1.5, %v1534
        %v1536 = vmul.f32 %v1531, %v1535
        %vm1537 = vweird.f32 %v1520
        %vm1538 = vweird.f32 %v1531
        %vm1539 = vmor %vm1537, %vm1538
        %v1540 = vsel %vm1539, %v1531, %v1536
        %v1541 = vmul.f32 %v1483, %v1530
        %v1542 = vmul.f32 %v1484, %v1540
        %v1543 = vmul.f32 %v1485, %v1530
        %v1544 = vmul.f32 %v1486, %v1540
        %v1545 = vmul.f32 %v1487, %v1530
        %v1546 = vmul.f32 %v1488, %v1540
        %v1547 = vmul.f32 %v1489, %v1530
        %v1548 = vmul.f32 %v1490, %v1540
        %1549 = vset.pattern.permute.xlu0 84
        %1550 = vperm.xlu0 %1549, %v183
        %v1551 = vpop.permute.xlu0 %1550
        %1553 = vset.pattern.permute.xlu0 84
        %1554 = vperm.xlu0 %1553, %v184
        %v1555 = vpop.permute.xlu0 %1554
        %1557 = vset.pattern.permute.xlu0 84
        %1558 = vperm.xlu0 %1557, %v185
        %v1559 = vpop.permute.xlu0 %1558
        %1561 = vset.pattern.permute.xlu0 84
        %1562 = vperm.xlu0 %1561, %v186
        %v1563 = vpop.permute.xlu0 %1562
        %v1565 = vmul.f32 %v1541, %v1551
        %v1566 = vmul.f32 %v1542, %v1551
        %v1567 = vmul.f32 %v1543, %v1555
        %v1568 = vmul.f32 %v1544, %v1555
        %v1569 = vmul.f32 %v1545, %v1559
        %v1570 = vmul.f32 %v1546, %v1559
        %v1571 = vmul.f32 %v1547, %v1563
        %v1572 = vmul.f32 %v1548, %v1563
        %1573 = vset.pattern.permute.xlu0 85
        %1574 = vperm.xlu0 %1573, %v183
        %v1575 = vpop.permute.xlu0 %1574
        %1577 = vset.pattern.permute.xlu0 85
        %1578 = vperm.xlu0 %1577, %v184
        %v1579 = vpop.permute.xlu0 %1578
        %1581 = vset.pattern.permute.xlu0 85
        %1582 = vperm.xlu0 %1581, %v185
        %v1583 = vpop.permute.xlu0 %1582
        %1585 = vset.pattern.permute.xlu0 85
        %1586 = vperm.xlu0 %1585, %v186
        %v1587 = vpop.permute.xlu0 %1586
        %v1589 = vadd.f32 %v1565, %v1575
        %v1590 = vadd.f32 %v1566, %v1575
        %v1591 = vadd.f32 %v1567, %v1579
        %v1592 = vadd.f32 %v1568, %v1579
        %v1593 = vadd.f32 %v1569, %v1583
        %v1594 = vadd.f32 %v1570, %v1583
        %v1595 = vadd.f32 %v1571, %v1587
        %v1596 = vadd.f32 %v1572, %v1587
        %v1597 = vmax.f32 %v1589, 0.0
        %v1598 = vmax.f32 %v1590, 0.0
        %v1599 = vmax.f32 %v1591, 0.0
        %v1600 = vmax.f32 %v1592, 0.0
        %v1601 = vmax.f32 %v1593, 0.0
        %v1602 = vmax.f32 %v1594, 0.0
        %v1603 = vmax.f32 %v1595, 0.0
        %v1604 = vmax.f32 %v1596, 0.0
        %1606 = vset.pattern.permute.xlu0 86
        %1607 = vperm.xlu0 %1606, %v187
        %v1608 = vpop.permute.xlu0 %1607
        %1610 = vrot.lane.b32.xlu0 %v187, 80
        %v1611 = vpop.permute.xlu0 %1610
        %v1612 = vsel %vm898, %v1611, 0
        %1614 = vmatpush.msra.mxu0 0.0
        %1615 = vmatpush.msra.mxu0 0.0
        %1616 = vmatpush.msra.mxu0 0.0
        %1617 = vmatpush.msra.mxu0 0.0
        %1618 = vmatpush.msra.mxu0 0.0
        %1619 = vmatpush.msra.mxu0 0.0
        %1620 = vmatpush.msra.mxu0 0.0
        %1621 = vmatpush.msra.mxu0 0.0
        %1622 = vmatpush.msra.mxu0 0.0
        %1623 = vmatpush.msra.mxu0 0.0
        %1624 = vmatpush.msra.mxu0 0.0
        %1625 = vmatpush.msra.mxu0 0.0
        %v1626 = vand.u32 %v1603, 4294901760
        %1627 = vmatpush.msra.mxu0 %v1626
        %v1628 = vand.u32 %v1601, 4294901760
        %1629 = vmatpush.msra.mxu0 %v1628
        %v1630 = vand.u32 %v1599, 4294901760
        %1631 = vmatpush.msra.mxu0 %v1630
        %v1632 = vand.u32 %v1597, 4294901760
        %1633 = vmatpush.msra.mxu0 %v1632
        %v1634 = vand.u32 %v1612, 4294901760
        %v1635 = vsub.f32 %v1612, %v1634
        %v1636 = vand.u32 %v1635, 4294901760
        %v1637 = vsub.f32 %v1635, %v1636
        %v1638 = vand.u32 %v1637, 4294901760
        %1639 = vmatmul.f32.gmra.mxu0 %v1638
        %v1640 = vpop.f32.mrf.mxu0
        %v1641 = vadd.f32 %v1608, %v1640
        %1642 = vdwg.mxu0
        %1643 = vmatpush.msra.mxu0 0.0
        %1644 = vmatpush.msra.mxu0 0.0
        %1645 = vmatpush.msra.mxu0 0.0
        %1646 = vmatpush.msra.mxu0 0.0
        %1647 = vmatpush.msra.mxu0 0.0
        %1648 = vmatpush.msra.mxu0 0.0
        %1649 = vmatpush.msra.mxu0 0.0
        %1650 = vmatpush.msra.mxu0 0.0
        %1651 = vmatpush.msra.mxu0 0.0
        %1652 = vmatpush.msra.mxu0 0.0
        %1653 = vmatpush.msra.mxu0 0.0
        %1654 = vmatpush.msra.mxu0 0.0
        %v1655 = vand.u32 %v1603, 4294901760
        %v1656 = vsub.f32 %v1603, %v1655
        %v1657 = vand.u32 %v1656, 4294901760
        %v1658 = vsub.f32 %v1656, %v1657
        %v1659 = vand.u32 %v1658, 4294901760
        %1660 = vmatpush.msra.mxu0 %v1659
        %v1661 = vand.u32 %v1601, 4294901760
        %v1662 = vsub.f32 %v1601, %v1661
        %v1663 = vand.u32 %v1662, 4294901760
        %v1664 = vsub.f32 %v1662, %v1663
        %v1665 = vand.u32 %v1664, 4294901760
        %1666 = vmatpush.msra.mxu0 %v1665
        %v1667 = vand.u32 %v1599, 4294901760
        %v1668 = vsub.f32 %v1599, %v1667
        %v1669 = vand.u32 %v1668, 4294901760
        %v1670 = vsub.f32 %v1668, %v1669
        %v1671 = vand.u32 %v1670, 4294901760
        %1672 = vmatpush.msra.mxu0 %v1671
        %v1673 = vand.u32 %v1597, 4294901760
        %v1674 = vsub.f32 %v1597, %v1673
        %v1675 = vand.u32 %v1674, 4294901760
        %v1676 = vsub.f32 %v1674, %v1675
        %v1677 = vand.u32 %v1676, 4294901760
        %1678 = vmatpush.msra.mxu0 %v1677
        %v1679 = vand.u32 %v1612, 4294901760
        %1680 = vmatmul.f32.gmra.mxu0 %v1679
        %v1681 = vpop.f32.mrf.mxu0
        %v1682 = vadd.f32 %v1641, %v1681
        %1683 = vdwg.mxu0
        %1684 = vmatpush.msra.mxu0 0.0
        %1685 = vmatpush.msra.mxu0 0.0
        %1686 = vmatpush.msra.mxu0 0.0
        %1687 = vmatpush.msra.mxu0 0.0
        %1688 = vmatpush.msra.mxu0 0.0
        %1689 = vmatpush.msra.mxu0 0.0
        %1690 = vmatpush.msra.mxu0 0.0
        %1691 = vmatpush.msra.mxu0 0.0
        %1692 = vmatpush.msra.mxu0 0.0
        %1693 = vmatpush.msra.mxu0 0.0
        %1694 = vmatpush.msra.mxu0 0.0
        %1695 = vmatpush.msra.mxu0 0.0
        %v1696 = vand.u32 %v1603, 4294901760
        %v1697 = vsub.f32 %v1603, %v1696
        %1698 = vmatpush.msra.mxu0 %v1697
        %v1699 = vand.u32 %v1601, 4294901760
        %v1700 = vsub.f32 %v1601, %v1699
        %1701 = vmatpush.msra.mxu0 %v1700
        %v1702 = vand.u32 %v1599, 4294901760
        %v1703 = vsub.f32 %v1599, %v1702
        %1704 = vmatpush.msra.mxu0 %v1703
        %v1705 = vand.u32 %v1597, 4294901760
        %v1706 = vsub.f32 %v1597, %v1705
        %1707 = vmatpush.msra.mxu0 %v1706
        %v1708 = vand.u32 %v1612, 4294901760
        %v1709 = vsub.f32 %v1612, %v1708
        %1710 = vmatmul.f32.gmra.mxu0 %v1709
        %v1711 = vpop.f32.mrf.mxu0
        %v1712 = vadd.f32 %v1682, %v1711
        %1713 = vdwg.mxu0
        %1714 = vmatpush.msra.mxu0 0.0
        %1715 = vmatpush.msra.mxu0 0.0
        %1716 = vmatpush.msra.mxu0 0.0
        %1717 = vmatpush.msra.mxu0 0.0
        %1718 = vmatpush.msra.mxu0 0.0
        %1719 = vmatpush.msra.mxu0 0.0
        %1720 = vmatpush.msra.mxu0 0.0
        %1721 = vmatpush.msra.mxu0 0.0
        %1722 = vmatpush.msra.mxu0 0.0
        %1723 = vmatpush.msra.mxu0 0.0
        %1724 = vmatpush.msra.mxu0 0.0
        %1725 = vmatpush.msra.mxu0 0.0
        %v1726 = vand.u32 %v1603, 4294901760
        %1727 = vmatpush.msra.mxu0 %v1726
        %v1728 = vand.u32 %v1601, 4294901760
        %1729 = vmatpush.msra.mxu0 %v1728
        %v1730 = vand.u32 %v1599, 4294901760
        %1731 = vmatpush.msra.mxu0 %v1730
        %v1732 = vand.u32 %v1597, 4294901760
        %1733 = vmatpush.msra.mxu0 %v1732
        %v1734 = vand.u32 %v1612, 4294901760
        %v1735 = vsub.f32 %v1612, %v1734
        %v1736 = vand.u32 %v1735, 4294901760
        %1737 = vmatmul.f32.gmra.mxu0 %v1736
        %v1738 = vpop.f32.mrf.mxu0
        %v1739 = vadd.f32 %v1712, %v1738
        %1740 = vdwg.mxu0
        %1741 = vmatpush.msra.mxu0 0.0
        %1742 = vmatpush.msra.mxu0 0.0
        %1743 = vmatpush.msra.mxu0 0.0
        %1744 = vmatpush.msra.mxu0 0.0
        %1745 = vmatpush.msra.mxu0 0.0
        %1746 = vmatpush.msra.mxu0 0.0
        %1747 = vmatpush.msra.mxu0 0.0
        %1748 = vmatpush.msra.mxu0 0.0
        %1749 = vmatpush.msra.mxu0 0.0
        %1750 = vmatpush.msra.mxu0 0.0
        %1751 = vmatpush.msra.mxu0 0.0
        %1752 = vmatpush.msra.mxu0 0.0
        %v1753 = vand.u32 %v1603, 4294901760
        %v1754 = vsub.f32 %v1603, %v1753
        %v1755 = vand.u32 %v1754, 4294901760
        %1756 = vmatpush.msra.mxu0 %v1755
        %v1757 = vand.u32 %v1601, 4294901760
        %v1758 = vsub.f32 %v1601, %v1757
        %v1759 = vand.u32 %v1758, 4294901760
        %1760 = vmatpush.msra.mxu0 %v1759
        %v1761 = vand.u32 %v1599, 4294901760
        %v1762 = vsub.f32 %v1599, %v1761
        %v1763 = vand.u32 %v1762, 4294901760
        %1764 = vmatpush.msra.mxu0 %v1763
        %v1765 = vand.u32 %v1597, 4294901760
        %v1766 = vsub.f32 %v1597, %v1765
        %v1767 = vand.u32 %v1766, 4294901760
        %1768 = vmatpush.msra.mxu0 %v1767
        %v1769 = vand.u32 %v1612, 4294901760
        %1770 = vmatmul.f32.gmra.mxu0 %v1769
        %v1771 = vpop.f32.mrf.mxu0
        %v1772 = vadd.f32 %v1739, %v1771
        %1773 = vdwg.mxu0
        %1774 = vmatpush.msra.mxu0 0.0
        %1775 = vmatpush.msra.mxu0 0.0
        %1776 = vmatpush.msra.mxu0 0.0
        %1777 = vmatpush.msra.mxu0 0.0
        %1778 = vmatpush.msra.mxu0 0.0
        %1779 = vmatpush.msra.mxu0 0.0
        %1780 = vmatpush.msra.mxu0 0.0
        %1781 = vmatpush.msra.mxu0 0.0
        %1782 = vmatpush.msra.mxu0 0.0
        %1783 = vmatpush.msra.mxu0 0.0
        %1784 = vmatpush.msra.mxu0 0.0
        %1785 = vmatpush.msra.mxu0 0.0
        %v1786 = vand.u32 %v1603, 4294901760
        %1787 = vmatpush.msra.mxu0 %v1786
        %v1788 = vand.u32 %v1601, 4294901760
        %1789 = vmatpush.msra.mxu0 %v1788
        %v1790 = vand.u32 %v1599, 4294901760
        %1791 = vmatpush.msra.mxu0 %v1790
        %v1792 = vand.u32 %v1597, 4294901760
        %1793 = vmatpush.msra.mxu0 %v1792
        %v1794 = vand.u32 %v1612, 4294901760
        %1795 = vmatmul.f32.gmra.mxu0 %v1794
        %v1796 = vpop.f32.mrf.mxu0
        %v1797 = vadd.f32 %v1772, %v1796
        %1798 = vdwg.mxu0
        %1799 = vmatpush.msra.mxu0 0.0
        %1800 = vmatpush.msra.mxu0 0.0
        %1801 = vmatpush.msra.mxu0 0.0
        %1802 = vmatpush.msra.mxu0 0.0
        %1803 = vmatpush.msra.mxu0 0.0
        %1804 = vmatpush.msra.mxu0 0.0
        %1805 = vmatpush.msra.mxu0 0.0
        %1806 = vmatpush.msra.mxu0 0.0
        %1807 = vmatpush.msra.mxu0 0.0
        %1808 = vmatpush.msra.mxu0 0.0
        %1809 = vmatpush.msra.mxu0 0.0
        %1810 = vmatpush.msra.mxu0 0.0
        %v1811 = vand.u32 %v1604, 4294901760
        %1812 = vmatpush.msra.mxu0 %v1811
        %v1813 = vand.u32 %v1602, 4294901760
        %1814 = vmatpush.msra.mxu0 %v1813
        %v1815 = vand.u32 %v1600, 4294901760
        %1816 = vmatpush.msra.mxu0 %v1815
        %v1817 = vand.u32 %v1598, 4294901760
        %1818 = vmatpush.msra.mxu0 %v1817
        %v1819 = vand.u32 %v1612, 4294901760
        %v1820 = vsub.f32 %v1612, %v1819
        %v1821 = vand.u32 %v1820, 4294901760
        %v1822 = vsub.f32 %v1820, %v1821
        %v1823 = vand.u32 %v1822, 4294901760
        %1824 = vmatmul.f32.gmra.mxu0 %v1823
        %v1825 = vpop.f32.mrf.mxu0
        %v1826 = vadd.f32 %v1608, %v1825
        %1827 = vdwg.mxu0
        %1828 = vmatpush.msra.mxu0 0.0
        %1829 = vmatpush.msra.mxu0 0.0
        %1830 = vmatpush.msra.mxu0 0.0
        %1831 = vmatpush.msra.mxu0 0.0
        %1832 = vmatpush.msra.mxu0 0.0
        %1833 = vmatpush.msra.mxu0 0.0
        %1834 = vmatpush.msra.mxu0 0.0
        %1835 = vmatpush.msra.mxu0 0.0
        %1836 = vmatpush.msra.mxu0 0.0
        %1837 = vmatpush.msra.mxu0 0.0
        %1838 = vmatpush.msra.mxu0 0.0
        %1839 = vmatpush.msra.mxu0 0.0
        %v1840 = vand.u32 %v1604, 4294901760
        %v1841 = vsub.f32 %v1604, %v1840
        %v1842 = vand.u32 %v1841, 4294901760
        %v1843 = vsub.f32 %v1841, %v1842
        %v1844 = vand.u32 %v1843, 4294901760
        %1845 = vmatpush.msra.mxu0 %v1844
        %v1846 = vand.u32 %v1602, 4294901760
        %v1847 = vsub.f32 %v1602, %v1846
        %v1848 = vand.u32 %v1847, 4294901760
        %v1849 = vsub.f32 %v1847, %v1848
        %v1850 = vand.u32 %v1849, 4294901760
        %1851 = vmatpush.msra.mxu0 %v1850
        %v1852 = vand.u32 %v1600, 4294901760
        %v1853 = vsub.f32 %v1600, %v1852
        %v1854 = vand.u32 %v1853, 4294901760
        %v1855 = vsub.f32 %v1853, %v1854
        %v1856 = vand.u32 %v1855, 4294901760
        %1857 = vmatpush.msra.mxu0 %v1856
        %v1858 = vand.u32 %v1598, 4294901760
        %v1859 = vsub.f32 %v1598, %v1858
        %v1860 = vand.u32 %v1859, 4294901760
        %v1861 = vsub.f32 %v1859, %v1860
        %v1862 = vand.u32 %v1861, 4294901760
        %1863 = vmatpush.msra.mxu0 %v1862
        %v1864 = vand.u32 %v1612, 4294901760
        %1865 = vmatmul.f32.gmra.mxu0 %v1864
        %v1866 = vpop.f32.mrf.mxu0
        %v1867 = vadd.f32 %v1826, %v1866
        %1868 = vdwg.mxu0
        %1869 = vmatpush.msra.mxu0 0.0
        %1870 = vmatpush.msra.mxu0 0.0
        %1871 = vmatpush.msra.mxu0 0.0
        %1872 = vmatpush.msra.mxu0 0.0
        %1873 = vmatpush.msra.mxu0 0.0
        %1874 = vmatpush.msra.mxu0 0.0
        %1875 = vmatpush.msra.mxu0 0.0
        %1876 = vmatpush.msra.mxu0 0.0
        %1877 = vmatpush.msra.mxu0 0.0
        %1878 = vmatpush.msra.mxu0 0.0
        %1879 = vmatpush.msra.mxu0 0.0
        %1880 = vmatpush.msra.mxu0 0.0
        %v1881 = vand.u32 %v1604, 4294901760
        %v1882 = vsub.f32 %v1604, %v1881
        %1883 = vmatpush.msra.mxu0 %v1882
        %v1884 = vand.u32 %v1602, 4294901760
        %v1885 = vsub.f32 %v1602, %v1884
        %1886 = vmatpush.msra.mxu0 %v1885
        %v1887 = vand.u32 %v1600, 4294901760
        %v1888 = vsub.f32 %v1600, %v1887
        %1889 = vmatpush.msra.mxu0 %v1888
        %v1890 = vand.u32 %v1598, 4294901760
        %v1891 = vsub.f32 %v1598, %v1890
        %1892 = vmatpush.msra.mxu0 %v1891
        %v1893 = vand.u32 %v1612, 4294901760
        %v1894 = vsub.f32 %v1612, %v1893
        %1895 = vmatmul.f32.gmra.mxu0 %v1894
        %v1896 = vpop.f32.mrf.mxu0
        %v1897 = vadd.f32 %v1867, %v1896
        %1898 = vdwg.mxu0
        %1899 = vmatpush.msra.mxu0 0.0
        %1900 = vmatpush.msra.mxu0 0.0
        %1901 = vmatpush.msra.mxu0 0.0
        %1902 = vmatpush.msra.mxu0 0.0
        %1903 = vmatpush.msra.mxu0 0.0
        %1904 = vmatpush.msra.mxu0 0.0
        %1905 = vmatpush.msra.mxu0 0.0
        %1906 = vmatpush.msra.mxu0 0.0
        %1907 = vmatpush.msra.mxu0 0.0
        %1908 = vmatpush.msra.mxu0 0.0
        %1909 = vmatpush.msra.mxu0 0.0
        %1910 = vmatpush.msra.mxu0 0.0
        %v1911 = vand.u32 %v1604, 4294901760
        %1912 = vmatpush.msra.mxu0 %v1911
        %v1913 = vand.u32 %v1602, 4294901760
        %1914 = vmatpush.msra.mxu0 %v1913
        %v1915 = vand.u32 %v1600, 4294901760
        %1916 = vmatpush.msra.mxu0 %v1915
        %v1917 = vand.u32 %v1598, 4294901760
        %1918 = vmatpush.msra.mxu0 %v1917
        %v1919 = vand.u32 %v1612, 4294901760
        %v1920 = vsub.f32 %v1612, %v1919
        %v1921 = vand.u32 %v1920, 4294901760
        %1922 = vmatmul.f32.gmra.mxu0 %v1921
        %v1923 = vpop.f32.mrf.mxu0
        %v1924 = vadd.f32 %v1897, %v1923
        %1925 = vdwg.mxu0
        %1926 = vmatpush.msra.mxu0 0.0
        %1927 = vmatpush.msra.mxu0 0.0
        %1928 = vmatpush.msra.mxu0 0.0
        %1929 = vmatpush.msra.mxu0 0.0
        %1930 = vmatpush.msra.mxu0 0.0
        %1931 = vmatpush.msra.mxu0 0.0
        %1932 = vmatpush.msra.mxu0 0.0
        %1933 = vmatpush.msra.mxu0 0.0
        %1934 = vmatpush.msra.mxu0 0.0
        %1935 = vmatpush.msra.mxu0 0.0
        %1936 = vmatpush.msra.mxu0 0.0
        %1937 = vmatpush.msra.mxu0 0.0
        %v1938 = vand.u32 %v1604, 4294901760
        %v1939 = vsub.f32 %v1604, %v1938
        %v1940 = vand.u32 %v1939, 4294901760
        %1941 = vmatpush.msra.mxu0 %v1940
        %v1942 = vand.u32 %v1602, 4294901760
        %v1943 = vsub.f32 %v1602, %v1942
        %v1944 = vand.u32 %v1943, 4294901760
        %1945 = vmatpush.msra.mxu0 %v1944
        %v1946 = vand.u32 %v1600, 4294901760
        %v1947 = vsub.f32 %v1600, %v1946
        %v1948 = vand.u32 %v1947, 4294901760
        %1949 = vmatpush.msra.mxu0 %v1948
        %v1950 = vand.u32 %v1598, 4294901760
        %v1951 = vsub.f32 %v1598, %v1950
        %v1952 = vand.u32 %v1951, 4294901760
        %1953 = vmatpush.msra.mxu0 %v1952
        %v1954 = vand.u32 %v1612, 4294901760
        %1955 = vmatmul.f32.gmra.mxu0 %v1954
        %v1956 = vpop.f32.mrf.mxu0
        %v1957 = vadd.f32 %v1924, %v1956
        %1958 = vdwg.mxu0
        %1959 = vmatpush.msra.mxu0 0.0
        %1960 = vmatpush.msra.mxu0 0.0
        %1961 = vmatpush.msra.mxu0 0.0
        %1962 = vmatpush.msra.mxu0 0.0
        %1963 = vmatpush.msra.mxu0 0.0
        %1964 = vmatpush.msra.mxu0 0.0
        %1965 = vmatpush.msra.mxu0 0.0
        %1966 = vmatpush.msra.mxu0 0.0
        %1967 = vmatpush.msra.mxu0 0.0
        %1968 = vmatpush.msra.mxu0 0.0
        %1969 = vmatpush.msra.mxu0 0.0
        %1970 = vmatpush.msra.mxu0 0.0
        %v1971 = vand.u32 %v1604, 4294901760
        %1972 = vmatpush.msra.mxu0 %v1971
        %v1973 = vand.u32 %v1602, 4294901760
        %1974 = vmatpush.msra.mxu0 %v1973
        %v1975 = vand.u32 %v1600, 4294901760
        %1976 = vmatpush.msra.mxu0 %v1975
        %v1977 = vand.u32 %v1598, 4294901760
        %1978 = vmatpush.msra.mxu0 %v1977
        %v1979 = vand.u32 %v1612, 4294901760
        %1980 = vmatmul.f32.gmra.mxu0 %v1979
        %v1981 = vpop.f32.mrf.mxu0
        %v1982 = vadd.f32 %v1957, %v1981
        %1983 = vdwg.mxu0
        %v1986 = vrot.slane %v1982, 4
        %vm1987 = vcmask 1043456
        %v1988 = vsel %vm1987, %v1797, %v1986
        %1990 = vst [vmem:[%s180] sm:$0xff] %v1988
        %s1991 = sand.u32 %s75, 1
        %s1992 = scalar_lea.sflag [#allocation4], %s1991
        %s1993 = sand.u32 %s75, 1
        %s1994 = smul.addr %s1993, 8
        %s1995 = scalar_lea.vmem [#allocation7], %s1994
        // Predicated region
        $region37: #{tpu_custom_call.1} parent=27 // pred_check
          %p1996 = pneg %p85
        $region38: #{tpu_custom_call.1} parent=27 // pred_check_branch
          %1998 = sbr.rel (%p1996) target = $region40
        $region39: #{tpu_custom_call.1} parent=27 // pred_region
          %s1999 = smul.u32 2, %s20
          %2001 = vsyncadd %s1992, 0
          %s2002 = smul.addr %s1999, 4
          %s2003 = scalar_lea.hbm %s2, %s2002
          %s2005 = sshll.u32 %s1995, 4
          %s2006 = int_to_ptr.vmem [resolvable:$true] %s2005
          %s2007 = sshll.u32 %s2003, 4
          %s2008 = int_to_ptr.hbm [resolvable:$true] %s2007
          %2010 = dma.vmem_to_hbm [thread:$0]  %s2006, 128, %s2008, %s1992
        $region40: #{tpu_custom_call.1} parent=27 // pred_fallthru
          _
      $region28: #{tpu_custom_call.1} parent=5 // pred_fallthru
        _
      %p2011 = scmp.le.s32.totalorder 2, %s15
      // Predicated region
      $region41: #{tpu_custom_call.1} parent=5 // pred_check
        %p2012 = pneg %p2011
      $region42: #{tpu_custom_call.1} parent=5 // pred_check_branch
        %2014 = sbr.rel (%p2012) target = $region44
      $region43: #{tpu_custom_call.1} parent=5 // pred_region
        %s2015 = ssub.s32 %s15, 2
        // Predicated region
        $region45: #{tpu_custom_call.1} parent=43 // pred_check
          %p2016 = pneg %p91
        $region46: #{tpu_custom_call.1} parent=43 // pred_check_branch
          %2018 = sbr.rel (%p2016) target = $region48
        $region47: #{tpu_custom_call.1} parent=43 // pred_region
          %s2019 = sand.u32 %s76, 1
          %s2020 = scalar_lea.sflag [#allocation4], %s2019
          %s2021 = sand.u32 %s76, 1
          %s2022 = smul.addr %s2021, 8
          %s2023 = scalar_lea.vmem [#allocation7], %s2022
          %2025 = dma.done %s2020, 128
        $region48: #{tpu_custom_call.1} parent=43 // pred_fallthru
          _
      $region44: #{tpu_custom_call.1} parent=5 // pred_fallthru
        _
    $region6: #{tpu_custom_call.1} parent=1 // loop_footer
      %s19 = sadd.s32 1, %s15
    $region7: #{tpu_custom_call.1} parent=1 // loop_footer_branch
      %14 = sbr.rel target = $region3
    $region8: #{tpu_custom_call.1} parent=1 // loop_exit
      _
    %2026 = vsyncpa [#allocation3], 1
    %s2027 = scalar_lea.sflag [#allocation3], 1
    %2028 = vsyncpa %s2027, 1
    %2029 = vsyncpa [#allocation6], 1
    %2030 = vsyncpa [#allocation4], 1
    %s2031 = scalar_lea.sflag [#allocation4], 1
    %2032 = vsyncpa %s2031, 1

</llo_original>
